<compile_context>
chip_gen: v6e
topology: v6e:2x2x1
jax: 0.10.0
libtpu: 0.0.40
codegen_flags: <defaults>
</compile_context>

<pallas_src>
import functools

import jax
import jax.numpy as jnp
from jax.experimental import pallas as pl
from jax.experimental.pallas import tpu as pltpu


_VMEM_BUDGET = 24 * 1024 * 1024   # conservative: fits v7x's 32 MiB scoped default
_VMEM_LIMIT = 32 * 1024 * 1024


def _round_up(x, m):
    return ((x + m - 1) // m) * m


def _choose_tiles(n, block_n):
    """Pick tm = tk (multiple of 128). Prefer big tiles (HBM roofline), but
    keep >= 2 row blocks when N allows so both v7x TensorCores get work."""
    if block_n is None:
        block_n = 512
    block_n = max(128, (block_n // 128) * 128)
    block_n = min(block_n, _round_up(n, 128))
    n_pad = _round_up(n, block_n)
    while block_n > 128 and (n_pad // block_n) < 2:
        block_n = max(128, ((block_n // 2) // 128) * 128)
        n_pad = _round_up(n, block_n)
    return block_n, n_pad


def _vmem_estimate(n_pad, h_pad, tm, tk, out_bytes, xw_resident, fuse_w2):
    est = 2 * tm * tk * 2                                     # A double buffer (bf16)
    est += (2 * n_pad * h_pad * 2) if xw_resident else (2 * tk * h_pad * 2)
    est += 2 * h_pad * 4                                      # bias
    if fuse_w2:
        est += 2 * h_pad * h_pad * 2                          # resident W2 (bf16)
    est += 2 * tm * h_pad * out_bytes                         # output double buffer
    est += tm * h_pad * 4                                     # f32 accumulator scratch
    return est


# ---------------------------------------------------------------------------
# Pallas kernel: one GCN aggregation
#   out = A @ XW + b            (layer 2)
#   out = relu(A @ XW + b) @ W2 (layer 1, fused feature transform)
# ---------------------------------------------------------------------------
def _make_kernel(*, apply_relu, fuse_w2, xw_resident, tk):
    def kernel(*refs):
        if fuse_w2:
            a_ref, xw_ref, b_ref, w2_ref, o_ref, acc_ref = refs
        else:
            a_ref, xw_ref, b_ref, o_ref, acc_ref = refs
        k = pl.program_id(1)

        @pl.when(k == 0)
        def _():
            acc_ref[...] = jnp.zeros_like(acc_ref)

        if xw_resident:
            start = pl.multiple_of(k * tk, 128)
            xw_blk = xw_ref[pl.ds(start, tk), :]
        else:
            xw_blk = xw_ref[...]

        # bf16 x bf16 -> f32 accumulation on the MXU.
        acc_ref[...] += jnp.dot(a_ref[...], xw_blk,
                                preferred_element_type=jnp.float32)

        @pl.when(k == pl.num_programs(1) - 1)
        def _():
            out = acc_ref[...] + b_ref[...]
            if apply_relu:
                out = jnp.maximum(out, 0.0)
            if fuse_w2:
                out = jnp.dot(out.astype(jnp.bfloat16), w2_ref[...],
                              preferred_element_type=jnp.float32)
            o_ref[...] = out.astype(o_ref.dtype)

    return kernel


def _aggregate(a, xw, b, *, w2=None, apply_relu, out_dtype, tm, tk, xw_resident):
    """Tiled  A[np, np] @ XW[np, hp] + b[1, hp]  (optional ReLU / fused @ W2)."""
    n_pad = a.shape[0]
    h_pad = xw.shape[1]
    assert n_pad % tm == 0 and n_pad % tk == 0
    fuse_w2 = w2 is not None

    kernel = _make_kernel(apply_relu=apply_relu, fuse_w2=fuse_w2,
                          xw_resident=xw_resident, tk=tk)

    in_specs = [pl.BlockSpec((tm, tk), lambda i, k: (i, k))]
    if xw_resident:
        # Constant block index -> DMA'd once, stays resident in VMEM.
        in_specs.append(pl.BlockSpec((n_pad, h_pad), lambda i, k: (0, 0)))
    else:
        in_specs.append(pl.BlockSpec((tk, h_pad), lambda i, k: (k, 0)))
    in_specs.append(pl.BlockSpec((1, h_pad), lambda i, k: (0, 0)))
    args = [a, xw, b]
    if fuse_w2:
        in_specs.append(pl.BlockSpec((h_pad, h_pad), lambda i, k: (0, 0)))
        args.append(w2)

    return pl.pallas_call(
        kernel,
        out_shape=jax.ShapeDtypeStruct((n_pad, h_pad), out_dtype),
        grid_spec=pltpu.PrefetchScalarGridSpec(
            num_scalar_prefetch=0,
            grid=(n_pad // tm, n_pad // tk),
            in_specs=in_specs,
            out_specs=pl.BlockSpec((tm, h_pad), lambda i, k: (i, 0)),
            scratch_shapes=[pltpu.VMEM((tm, h_pad), jnp.float32)],
        ),
        compiler_params=pltpu.CompilerParams(
            dimension_semantics=("parallel", "arbitrary"),
            vmem_limit_bytes=_VMEM_LIMIT,
        ),
    )(*args)


# ---------------------------------------------------------------------------
# Normalized adjacency, built directly at padded size in the kernel dtype
# ---------------------------------------------------------------------------
def _normalized_adjacency(edge_index, num_nodes, n_pad, dtype):
    """PyG GCNConv normalization  D^{-1/2} (A + I) D^{-1/2}.

    Built directly at (n_pad, n_pad) so padded rows/cols are exactly zero and
    no separate pad/cast pass over the N^2 operand is needed."""
    src = edge_index[0]
    dst = edge_index[1]
    a = jnp.zeros((n_pad, n_pad), jnp.float32)
    # message flows source -> target: row i (target) aggregates column j (source)
    a = a.at[dst, src].set(1.0)
    diag = jnp.arange(num_nodes)
    a = a.at[diag, diag].add(1.0)          # self loops on real nodes only
    deg = a.sum(axis=1)
    d_inv_sqrt = jnp.where(deg > 0, jax.lax.rsqrt(deg), 0.0)
    return (d_inv_sqrt[:, None] * a * d_inv_sqrt[None, :]).astype(dtype)


# ---------------------------------------------------------------------------
# Full GCN forward
# ---------------------------------------------------------------------------
@functools.partial(jax.jit, static_argnames=("block_n",))
def gcn_forward(x, edge_index, w1, b1, w2, b2, *, block_n=None):
    n, nfeat = x.shape
    nhid = w2.shape[1]
    h_pad = _round_up(nhid, 128)            # lane-dense hidden/output dim (= tn)

    tm, n_pad = _choose_tiles(n, block_n)
    tk = tm
    fuse_w2 = (2 * h_pad * h_pad * 2) <= 4 * 1024 * 1024
    xw_resident = _vmem_estimate(n_pad, h_pad, tm, tk, 4, True, fuse_w2) <= _VMEM_BUDGET
    # If even the streamed variant overshoots (very large h_pad), shrink row tile.
    while (_vmem_estimate(n_pad, h_pad, tm, tk, 4, xw_resident, fuse_w2) > _VMEM_BUDGET
           and tm > 128):
        tm = max(128, ((tm // 2) // 128) * 128)
        tk = tm
        n_pad = _round_up(n, tm)
        xw_resident = (_vmem_estimate(n_pad, h_pad, tm, tk, 4, True, fuse_w2)
                       <= _VMEM_BUDGET)

    # ---- padded operands (padding rows/cols are zero => inert) ----
    a_p = _normalized_adjacency(edge_index, n, n_pad, jnp.bfloat16)
    x_p = jnp.pad(x, ((0, n_pad - n), (0, 0)))
    w1_p = jnp.pad(w1, ((0, 0), (0, h_pad - nhid)))
    b1_p = jnp.pad(b1, ((0, 0), (0, h_pad - nhid)))
    w2_p = jnp.pad(w2, ((0, h_pad - nhid), (0, h_pad - nhid))).astype(jnp.bfloat16)
    b2_p = jnp.pad(b2, ((0, 0), (0, h_pad - nhid)))

    # ---- layer 1: tiny X @ W1 left to XLA, then fused relu(A @ XW1 + b1) @ W2 ----
    xw1 = jnp.dot(x_p, w1_p, preferred_element_type=jnp.float32).astype(jnp.bfloat16)
    if fuse_w2:
        hw2 = _aggregate(a_p, xw1, b1_p, w2=w2_p, apply_relu=True,
                         out_dtype=jnp.bfloat16, tm=tm, tk=tk,
                         xw_resident=xw_resident)
    else:
        h = _aggregate(a_p, xw1, b1_p, apply_relu=True, out_dtype=jnp.bfloat16,
                       tm=tm, tk=tk, xw_resident=xw_resident)
        hw2 = jnp.dot(h, w2_p, preferred_element_type=jnp.float32).astype(jnp.bfloat16)

    # ---- dropout: eval mode -> identity ----
    # TODO(synk): wire pltpu.prng_seed/prng_random_bits Bernoulli mask if a
    # training-mode forward is ever needed.

    # ---- layer 2: A @ (h @ W2) + b2 ----
    out = _aggregate(a_p, hw2, b2_p, apply_relu=False, out_dtype=jnp.float32,
                     tm=tm, tk=tk, xw_resident=xw_resident)

    return out[:n, :nhid]


# ---------------------------------------------------------------------------
# Glue: parameter init and pure-JAX reference
# ---------------------------------------------------------------------------
def glorot(key, shape):
    fan_in, fan_out = shape
    limit = jnp.sqrt(6.0 / (fan_in + fan_out))
    return jax.random.uniform(key, shape, jnp.float32, -limit, limit)


def reference_gcn(a_hat, x, w1, b1, w2, b2):
    """Pure-JAX reference replicating the kernel's bf16-operand / f32-accum math."""
    ab = a_hat.astype(jnp.bfloat16)
    w2b = w2.astype(jnp.bfloat16)
    xw1 = jnp.dot(x, w1, preferred_element_type=jnp.float32).astype(jnp.bfloat16)
    h = jnp.maximum(jnp.dot(ab, xw1, preferred_element_type=jnp.float32) + b1, 0.0)
    hw2 = jnp.dot(h.astype(jnp.bfloat16), w2b,
                  preferred_element_type=jnp.float32).astype(jnp.bfloat16)
    return jnp.dot(ab, hw2, preferred_element_type=jnp.float32) + b2


if __name__ == "__main__":
    N, NFEAT, NHID = 200, 8, 32   # N pads to 256 -> grid (2 row blocks, 2 K blocks)

    key = jax.random.PRNGKey(0)
    k_x, k_w1, k_b1, k_w2, k_b2 = jax.random.split(key, 5)

    # Node features [N, NFEAT]
    x = jax.random.normal(k_x, (N, NFEAT), jnp.float32)

    # Undirected ring graph as edge_index [2, 2N]
    idx = jnp.arange(N, dtype=jnp.int32)
    nxt = (idx + 1) % N
    edge_index = jnp.concatenate(
        [jnp.stack([idx, nxt], axis=0), jnp.stack([nxt, idx], axis=0)], axis=1
    )

    # Parameters (GCNConv: glorot weights; small biases to exercise the path)
    w1 = glorot(k_w1, (NFEAT, NHID))
    b1 = 0.1 * jax.random.normal(k_b1, (1, NHID), jnp.float32)
    w2 = glorot(k_w2, (NHID, NHID))
    b2 = 0.1 * jax.random.normal(k_b2, (1, NHID), jnp.float32)

    out = gcn_forward(x, edge_index, w1, b1, w2, b2)
    out = jax.block_until_ready(out)

    a_hat = _normalized_adjacency(edge_index, N, N, jnp.float32)
    ref = reference_gcn(a_hat, x, w1, b1, w2, b2)

    assert out.shape == (N, NHID)
    max_err = float(jnp.max(jnp.abs(out - ref)))
    assert jnp.allclose(out, ref, atol=1e-2, rtol=1e-2), max_err

    print("KERNEL_OK")
</pallas_src>

<mosaic_0001>
module attributes {stable_mosaic.version = 11 : i64} {
  func.func private @main(%arg0: i32) attributes {dimension_semantics = [#tpu.dimension_semantics<core_parallel>], iteration_bounds = array<i64: 2>, tpu.core_type = #tpu.core_type<sc_scalar_subcore>, window_params = []} {
    return
  }
}

module attributes {stable_mosaic.version = 11 : i64} {
  func.func private @main(%arg0: i32) attributes {dimension_semantics = [#tpu.dimension_semantics<core_parallel>], iteration_bounds = array<i64: 2>, tpu.core_type = #tpu.core_type<sc_scalar_subcore>, window_params = []} {
    return
  }
}

module attributes {stable_mosaic.version = 11 : i64} {
  func.func @kernel(%arg0: i32, %arg1: i32, %arg2: memref<128x128xbf16, #tpu.memory_space<vmem>>, %arg3: memref<256x128xbf16, #tpu.memory_space<vmem>>, %arg4: memref<1x128xf32, #tpu.memory_space<vmem>>, %arg5: memref<128x128xbf16, #tpu.memory_space<vmem>>, %arg6: memref<128x128xbf16, #tpu.memory_space<vmem>>, %arg7: memref<128x128xf32, #tpu.memory_space<vmem>>) attributes {dimension_semantics = [#tpu.dimension_semantics<parallel>, #tpu.dimension_semantics<arbitrary>], iteration_bounds = array<i64: 2, 2>, scalar_prefetch = 0 : i64, scratch_operands = 1 : i64, tpu.core_type = #tpu.core_type<tc>, window_params = [{transform_indices = @transform_0, window_bounds = array<i64: 128, 128>}, {pipeline_mode = #tpu.pipeline_mode<synchronous>, transform_indices = @transform_1, window_bounds = array<i64: 256, 128>}, {pipeline_mode = #tpu.pipeline_mode<synchronous>, transform_indices = @transform_2, window_bounds = array<i64: 1, 128>}, {pipeline_mode = #tpu.pipeline_mode<synchronous>, transform_indices = @transform_3, window_bounds = array<i64: 128, 128>}, {transform_indices = @transform_4, window_bounds = array<i64: 128, 128>}]} {
    %c0_i32 = arith.constant 0 : i32
    %0 = arith.cmpi eq, %arg1, %c0_i32 : i32
    %1 = arith.extui %0 : i1 to i32
    %c0_i32_0 = arith.constant 0 : i32
    %2 = arith.cmpi ne, %1, %c0_i32_0 : i32
    scf.if %2 {
      %cst_8 = arith.constant 0.000000e+00 : f32
      %15 = vector.broadcast %cst_8 : f32 to vector<128x128xf32>
      %c0_9 = arith.constant 0 : index
      %c0_10 = arith.constant 0 : index
      %16 = vector.load %arg7[%c0_9, %c0_10] : memref<128x128xf32, #tpu.memory_space<vmem>>, vector<128x128xf32>
      tpu.vector_store %arg7[%c0_9, %c0_10], %15 {strides = array<i32>} : memref<128x128xf32, #tpu.memory_space<vmem>>, vector<128x128xf32>,
    } else {
    }
    %c128_i32 = arith.constant 128 : i32
    %3 = arith.muli %arg1, %c128_i32 : i32
    %4 = tpu.assume_multiple %3, 128 : i32
    %5 = arith.index_cast %4 : i32 to index
    %c0 = arith.constant 0 : index
    %6 = vector.load %arg3[%5, %c0] : memref<256x128xbf16, #tpu.memory_space<vmem>>, vector<128x128xbf16>
    %c0_1 = arith.constant 0 : index
    %c0_2 = arith.constant 0 : index
    %7 = vector.load %arg7[%c0_1, %c0_2] : memref<128x128xf32, #tpu.memory_space<vmem>>, vector<128x128xf32>
    %c0_3 = arith.constant 0 : index
    %c0_4 = arith.constant 0 : index
    %8 = vector.load %arg2[%c0_3, %c0_4] : memref<128x128xbf16, #tpu.memory_space<vmem>>, vector<128x128xbf16>
    %cst = arith.constant dense<0.000000e+00> : vector<128x128xf32>
    %9 = tpu.matmul %8, %6, %cst {dimension_numbers = #tpu.dot_dimension_numbers<[1], [0], [0], [1], [0, 0, 1, 1], [], []>} : vector<128x128xbf16>, vector<128x128xbf16>, vector<128x128xf32> -> vector<128x128xf32>
    %10 = arith.addf %7, %9 : vector<128x128xf32>
    %c0_5 = arith.constant 0 : index
    %c0_6 = arith.constant 0 : index
    %11 = vector.load %arg7[%c0_5, %c0_6] : memref<128x128xf32, #tpu.memory_space<vmem>>, vector<128x128xf32>
    tpu.vector_store %arg7[%c0_5, %c0_6], %10 {strides = array<i32>} : memref<128x128xf32, #tpu.memory_space<vmem>>, vector<128x128xf32>,
    %c1_i32 = arith.constant 1 : i32
    %12 = arith.cmpi eq, %arg1, %c1_i32 : i32
    %13 = arith.extui %12 : i1 to i32
    %c0_i32_7 = arith.constant 0 : i32
    %14 = arith.cmpi ne, %13, %c0_i32_7 : i32
    scf.if %14 {
      %c0_8 = arith.constant 0 : index
      %c0_9 = arith.constant 0 : index
      %15 = vector.load %arg7[%c0_8, %c0_9] : memref<128x128xf32, #tpu.memory_space<vmem>>, vector<128x128xf32>
      %c0_10 = arith.constant 0 : index
      %c0_11 = arith.constant 0 : index
      %16 = vector.load %arg4[%c0_10, %c0_11] : memref<1x128xf32, #tpu.memory_space<vmem>>, vector<1x128xf32>
      %17 = vector.broadcast %16 : vector<1x128xf32> to vector<128x128xf32>
      %18 = arith.addf %15, %17 : vector<128x128xf32>
      %cst_12 = arith.constant 0.000000e+00 : f32
      %19 = vector.broadcast %cst_12 : f32 to vector<128x128xf32>
      %20 = arith.maximumf %18, %19 : vector<128x128xf32>
      %21 = arith.truncf %20 : vector<128x128xf32> to vector<128x128xbf16>
      %c0_13 = arith.constant 0 : index
      %c0_14 = arith.constant 0 : index
      %22 = vector.load %arg5[%c0_13, %c0_14] : memref<128x128xbf16, #tpu.memory_space<vmem>>, vector<128x128xbf16>
      %cst_15 = arith.constant dense<0.000000e+00> : vector<128x128xf32>
      %23 = tpu.matmul %21, %22, %cst_15 {dimension_numbers = #tpu.dot_dimension_numbers<[1], [0], [0], [1], [0, 0, 1, 1], [], []>} : vector<128x128xbf16>, vector<128x128xbf16>, vector<128x128xf32> -> vector<128x128xf32>
      %24 = arith.truncf %23 : vector<128x128xf32> to vector<128x128xbf16>
      %c0_16 = arith.constant 0 : index
      %c0_17 = arith.constant 0 : index
      %25 = vector.load %arg6[%c0_16, %c0_17] : memref<128x128xbf16, #tpu.memory_space<vmem>>, vector<128x128xbf16>
      tpu.vector_store %arg6[%c0_16, %c0_17], %24 {strides = array<i32>} : memref<128x128xbf16, #tpu.memory_space<vmem>>, vector<128x128xbf16>,
    } else {
    }
    return
  }
  func.func @transform_0(%arg0: i32, %arg1: i32) -> (i32, i32) {
    %c0_i32 = arith.constant 0 : i32
    return %arg0, %arg1 : i32, i32
  }
  func.func @transform_1(%arg0: i32, %arg1: i32) -> (i32, i32) {
    %c0_i32 = arith.constant 0 : i32
    %c0_i32_0 = arith.constant 0 : i32
    %c0_i32_1 = arith.constant 0 : i32
    return %c0_i32, %c0_i32_0 : i32, i32
  }
  func.func @transform_2(%arg0: i32, %arg1: i32) -> (i32, i32) {
    %c0_i32 = arith.constant 0 : i32
    %c0_i32_0 = arith.constant 0 : i32
    %c0_i32_1 = arith.constant 0 : i32
    return %c0_i32, %c0_i32_0 : i32, i32
  }
  func.func @transform_3(%arg0: i32, %arg1: i32) -> (i32, i32) {
    %c0_i32 = arith.constant 0 : i32
    %c0_i32_0 = arith.constant 0 : i32
    %c0_i32_1 = arith.constant 0 : i32
    return %c0_i32, %c0_i32_0 : i32, i32
  }
  func.func @transform_4(%arg0: i32, %arg1: i32) -> (i32, i32) {
    %c0_i32 = arith.constant 0 : i32
    %c0_i32_0 = arith.constant 0 : i32
    return %arg0, %c0_i32 : i32, i32
  }
}

module attributes {stable_mosaic.version = 11 : i64} {
  func.func @kernel(%arg0: i32, %arg1: i32, %arg2: memref<128x128xbf16, #tpu.memory_space<vmem>>, %arg3: memref<256x128xbf16, #tpu.memory_space<vmem>>, %arg4: memref<1x128xf32, #tpu.memory_space<vmem>>, %arg5: memref<128x128xf32, #tpu.memory_space<vmem>>, %arg6: memref<128x128xf32, #tpu.memory_space<vmem>>) attributes {dimension_semantics = [#tpu.dimension_semantics<parallel>, #tpu.dimension_semantics<arbitrary>], iteration_bounds = array<i64: 2, 2>, scalar_prefetch = 0 : i64, scratch_operands = 1 : i64, tpu.core_type = #tpu.core_type<tc>, window_params = [{transform_indices = @transform_0, window_bounds = array<i64: 128, 128>}, {pipeline_mode = #tpu.pipeline_mode<synchronous>, transform_indices = @transform_1, window_bounds = array<i64: 256, 128>}, {pipeline_mode = #tpu.pipeline_mode<synchronous>, transform_indices = @transform_2, window_bounds = array<i64: 1, 128>}, {transform_indices = @transform_3, window_bounds = array<i64: 128, 128>}]} {
    %c0_i32 = arith.constant 0 : i32
    %0 = arith.cmpi eq, %arg1, %c0_i32 : i32
    %1 = arith.extui %0 : i1 to i32
    %c0_i32_0 = arith.constant 0 : i32
    %2 = arith.cmpi ne, %1, %c0_i32_0 : i32
    scf.if %2 {
      %cst_8 = arith.constant 0.000000e+00 : f32
      %15 = vector.broadcast %cst_8 : f32 to vector<128x128xf32>
      %c0_9 = arith.constant 0 : index
      %c0_10 = arith.constant 0 : index
      %16 = vector.load %arg6[%c0_9, %c0_10] : memref<128x128xf32, #tpu.memory_space<vmem>>, vector<128x128xf32>
      tpu.vector_store %arg6[%c0_9, %c0_10], %15 {strides = array<i32>} : memref<128x128xf32, #tpu.memory_space<vmem>>, vector<128x128xf32>,
    } else {
    }
    %c128_i32 = arith.constant 128 : i32
    %3 = arith.muli %arg1, %c128_i32 : i32
    %4 = tpu.assume_multiple %3, 128 : i32
    %5 = arith.index_cast %4 : i32 to index
    %c0 = arith.constant 0 : index
    %6 = vector.load %arg3[%5, %c0] : memref<256x128xbf16, #tpu.memory_space<vmem>>, vector<128x128xbf16>
    %c0_1 = arith.constant 0 : index
    %c0_2 = arith.constant 0 : index
    %7 = vector.load %arg6[%c0_1, %c0_2] : memref<128x128xf32, #tpu.memory_space<vmem>>, vector<128x128xf32>
    %c0_3 = arith.constant 0 : index
    %c0_4 = arith.constant 0 : index
    %8 = vector.load %arg2[%c0_3, %c0_4] : memref<128x128xbf16, #tpu.memory_space<vmem>>, vector<128x128xbf16>
    %cst = arith.constant dense<0.000000e+00> : vector<128x128xf32>
    %9 = tpu.matmul %8, %6, %cst {dimension_numbers = #tpu.dot_dimension_numbers<[1], [0], [0], [1], [0, 0, 1, 1], [], []>} : vector<128x128xbf16>, vector<128x128xbf16>, vector<128x128xf32> -> vector<128x128xf32>
    %10 = arith.addf %7, %9 : vector<128x128xf32>
    %c0_5 = arith.constant 0 : index
    %c0_6 = arith.constant 0 : index
    %11 = vector.load %arg6[%c0_5, %c0_6] : memref<128x128xf32, #tpu.memory_space<vmem>>, vector<128x128xf32>
    tpu.vector_store %arg6[%c0_5, %c0_6], %10 {strides = array<i32>} : memref<128x128xf32, #tpu.memory_space<vmem>>, vector<128x128xf32>,
    %c1_i32 = arith.constant 1 : i32
    %12 = arith.cmpi eq, %arg1, %c1_i32 : i32
    %13 = arith.extui %12 : i1 to i32
    %c0_i32_7 = arith.constant 0 : i32
    %14 = arith.cmpi ne, %13, %c0_i32_7 : i32
    scf.if %14 {
      %c0_8 = arith.constant 0 : index
      %c0_9 = arith.constant 0 : index
      %15 = vector.load %arg6[%c0_8, %c0_9] : memref<128x128xf32, #tpu.memory_space<vmem>>, vector<128x128xf32>
      %c0_10 = arith.constant 0 : index
      %c0_11 = arith.constant 0 : index
      %16 = vector.load %arg4[%c0_10, %c0_11] : memref<1x128xf32, #tpu.memory_space<vmem>>, vector<1x128xf32>
      %17 = vector.broadcast %16 : vector<1x128xf32> to vector<128x128xf32>
      %18 = arith.addf %15, %17 : vector<128x128xf32>
      %c0_12 = arith.constant 0 : index
      %c0_13 = arith.constant 0 : index
      %19 = vector.load %arg5[%c0_12, %c0_13] : memref<128x128xf32, #tpu.memory_space<vmem>>, vector<128x128xf32>
      tpu.vector_store %arg5[%c0_12, %c0_13], %18 {strides = array<i32>} : memref<128x128xf32, #tpu.memory_space<vmem>>, vector<128x128xf32>,
    } else {
    }
    return
  }
  func.func @transform_0(%arg0: i32, %arg1: i32) -> (i32, i32) {
    %c0_i32 = arith.constant 0 : i32
    return %arg0, %arg1 : i32, i32
  }
  func.func @transform_1(%arg0: i32, %arg1: i32) -> (i32, i32) {
    %c0_i32 = arith.constant 0 : i32
    %c0_i32_0 = arith.constant 0 : i32
    %c0_i32_1 = arith.constant 0 : i32
    return %c0_i32, %c0_i32_0 : i32, i32
  }
  func.func @transform_2(%arg0: i32, %arg1: i32) -> (i32, i32) {
    %c0_i32 = arith.constant 0 : i32
    %c0_i32_0 = arith.constant 0 : i32
    %c0_i32_1 = arith.constant 0 : i32
    return %c0_i32, %c0_i32_0 : i32, i32
  }
  func.func @transform_3(%arg0: i32, %arg1: i32) -> (i32, i32) {
    %c0_i32 = arith.constant 0 : i32
    %c0_i32_0 = arith.constant 0 : i32
    return %arg0, %c0_i32 : i32, i32
  }
}

</mosaic_0001>

<llo_original>
// kernel: gcn_forward.2
$region0: #{gcn_forward.2}
  #allocation0 [shape = 'u32[]', space=smem, size = 0x4, offset = 0x4, fixed_abs, tag = 'smem constant byte address 0x4 - core index']
  #allocation1 [shape = 'u32[144,128]{1,0:T(1,128)}', space=vmem, size = 0x12000, scoped, tag = 'internal scratch']
  #allocation2 [shape = 'f32[128,128]{1,0:T(8,128)}', space=vmem, size = 0x10000, scoped, tag = 'scratch operand']
  %s0 = inlined_call_operand.vmem [shape: bf16[256,256], index: 0, kind: input, shape index: {}]
  %s1 = inlined_call_operand.vmem [shape: bf16[256,128], index: 1, kind: input, shape index: {}]
  %s2 = inlined_call_operand.vmem [shape: f32[1,128], index: 2, kind: input, shape index: {}]
  %s3 = inlined_call_operand.vmem [shape: bf16[128,128], index: 3, kind: input, shape index: {}]
  %s4 = inlined_call_operand.vmem [shape: bf16[256,128], index: 4, kind: output, shape index: {}]
  %s5 = sld [smem:[#allocation0]]
  $region98: #{gcn_forward.2} parent=0
    _
  %s7 = ssub.s32 1, %s5
  %s8 = scalar_select 0, %s7, %s5
  $region1: #{gcn_forward.2} parent=0
    #allocation3 [shape = 'u8[65536]{0}', space=vmem, size = 0x10000, scoped, tag = 'input window, operand 0']
    loop: start=0, step=1, limit=6
    $region2: #{gcn_forward.2} parent=1 // loop_pre_header
      _
    $region3: #{gcn_forward.2} parent=1 // loop_header
      %s10 = sphi 0, %s14
      %p11 = scmp.ge.s32.totalorder %s10, 6
      %s17 = sphi 0, %s29
      %s18 = sphi 0, %s25
      %s19 = sphi 0, %s17
      %s20 = sphi 0, %s18
      %s21 = sphi 0, %s19
      %s22 = sphi 0, %s20
      %s34 = sphi 0, %s36
      %s37 = sphi 0, %s34
      %s38 = sphi 0, %s37
      %s54 = sphi 0, %s38
      %s58 = sphi 0, %s58
      %s60 = sphi 0, %s58
      %s61 = sphi 0, %s60
      %s75 = sphi 0, %s61
      %s79 = sphi 0, %s79
      %s81 = sphi 0, %s79
      %s82 = sphi 0, %s81
      %s96 = sphi 0, %s82
      %s100 = sphi 0, %s100
      %s102 = sphi 0, %s100
      %s103 = sphi 0, %s102
      %s117 = sphi 0, %s103
      %s123 = sphi 0, %s125
      %s126 = sphi 0, %s123
      %s127 = sphi 0, %s126
      %s143 = sphi 0, %s127
    $region4: #{gcn_forward.2} parent=1 // loop_header_branch
      %13 = sbr.rel (%p11) target = $region8
    $region5: #{gcn_forward.2} parent=1 // loop_body
      %s15 = ssub.s32 %s10, 1
      %s16 = ssub.s32 %s10, 2
      %s23 = sadd.s32 1, %s18
      %p24 = scmp.ge.s32.totalorder %s23, 2
      %s25 = scalar_select %p24, 0, %s23
      %s26 = sadd.s32 1, %s17
      %s27 = scalar_select %p24, %s26, %s17
      %p28 = scmp.ge.s32.totalorder %s27, 2
      %s29 = scalar_select %p28, 0, %s27
      %s30 = ssub.s32 %s17, %s29
      %s31 = ssub.s32 %s18, %s25
      %s32 = sor.u32 %s30, %s31
      %p33 = scmp.eq.s32.totalorder %s32, 0
      %s35 = sadd.s32 %s34, 1
      %s36 = scalar_select %p33, %s34, %s35
      %p39 = pneg %p33
      %p40 = scmp.eq.s32.totalorder %s10, 3
      %p41 = por %p39, %p40
      %p42 = scmp.ne.s32.totalorder %s34, %s37
      %p43 = scmp.eq.s32.totalorder %s10, 0
      %p44 = por %p42, %p43
      %p45 = scmp.ne.s32.totalorder %s34, %s37
      %p46 = scmp.eq.s32.totalorder %s15, 3
      %p47 = por %p45, %p46
      %p48 = scmp.ne.s32.totalorder %s37, %s38
      %p49 = scmp.eq.s32.totalorder %s15, 0
      %p50 = por %p48, %p49
      %p51 = scmp.ne.s32.totalorder %s37, %s38
      %p52 = scmp.eq.s32.totalorder %s16, 3
      %p53 = por %p51, %p52
      %p55 = scmp.ne.s32.totalorder %s38, %s54
      %p56 = scmp.eq.s32.totalorder %s16, 0
      %p57 = por %p55, %p56
      %s59 = sadd.s32 %s58, 1
      %p62 = scmp.eq.s32.totalorder %s10, 3
      %p63 = scmp.ne.s32.totalorder %s58, %s60
      %p64 = scmp.eq.s32.totalorder %s10, 0
      %p65 = por %p63, %p64
      %p66 = scmp.ne.s32.totalorder %s58, %s60
      %p67 = scmp.eq.s32.totalorder %s15, 3
      %p68 = por %p66, %p67
      %p69 = scmp.ne.s32.totalorder %s60, %s61
      %p70 = scmp.eq.s32.totalorder %s15, 0
      %p71 = por %p69, %p70
      %p72 = scmp.ne.s32.totalorder %s60, %s61
      %p73 = scmp.eq.s32.totalorder %s16, 3
      %p74 = por %p72, %p73
      %p76 = scmp.ne.s32.totalorder %s61, %s75
      %p77 = scmp.eq.s32.totalorder %s16, 0
      %p78 = por %p76, %p77
      %s80 = sadd.s32 %s79, 1
      %p83 = scmp.eq.s32.totalorder %s10, 3
      %p84 = scmp.ne.s32.totalorder %s79, %s81
      %p85 = scmp.eq.s32.totalorder %s10, 0
      %p86 = por %p84, %p85
      %p87 = scmp.ne.s32.totalorder %s79, %s81
      %p88 = scmp.eq.s32.totalorder %s15, 3
      %p89 = por %p87, %p88
      %p90 = scmp.ne.s32.totalorder %s81, %s82
      %p91 = scmp.eq.s32.totalorder %s15, 0
      %p92 = por %p90, %p91
      %p93 = scmp.ne.s32.totalorder %s81, %s82
      %p94 = scmp.eq.s32.totalorder %s16, 3
      %p95 = por %p93, %p94
      %p97 = scmp.ne.s32.totalorder %s82, %s96
      %p98 = scmp.eq.s32.totalorder %s16, 0
      %p99 = por %p97, %p98
      %s101 = sadd.s32 %s100, 1
      %p104 = scmp.eq.s32.totalorder %s10, 3
      %p105 = scmp.ne.s32.totalorder %s100, %s102
      %p106 = scmp.eq.s32.totalorder %s10, 0
      %p107 = por %p105, %p106
      %p108 = scmp.ne.s32.totalorder %s100, %s102
      %p109 = scmp.eq.s32.totalorder %s15, 3
      %p110 = por %p108, %p109
      %p111 = scmp.ne.s32.totalorder %s102, %s103
      %p112 = scmp.eq.s32.totalorder %s15, 0
      %p113 = por %p111, %p112
      %p114 = scmp.ne.s32.totalorder %s102, %s103
      %p115 = scmp.eq.s32.totalorder %s16, 3
      %p116 = por %p114, %p115
      %p118 = scmp.ne.s32.totalorder %s103, %s117
      %p119 = scmp.eq.s32.totalorder %s16, 0
      %p120 = por %p118, %p119
      %s121 = ssub.s32 %s17, %s29
      %p122 = scmp.eq.s32.totalorder %s121, 0
      %s124 = sadd.s32 %s123, 1
      %s125 = scalar_select %p122, %s123, %s124
      %p128 = pneg %p122
      %p129 = scmp.eq.s32.totalorder %s10, 3
      %p130 = por %p128, %p129
      %p131 = scmp.ne.s32.totalorder %s123, %s126
      %p132 = scmp.eq.s32.totalorder %s10, 0
      %p133 = por %p131, %p132
      %p134 = scmp.ne.s32.totalorder %s123, %s126
      %p135 = scmp.eq.s32.totalorder %s15, 3
      %p136 = por %p134, %p135
      %p137 = scmp.ne.s32.totalorder %s126, %s127
      %p138 = scmp.eq.s32.totalorder %s15, 0
      %p139 = por %p137, %p138
      %p140 = scmp.ne.s32.totalorder %s126, %s127
      %p141 = scmp.eq.s32.totalorder %s16, 3
      %p142 = por %p140, %p141
      %p144 = scmp.ne.s32.totalorder %s127, %s143
      %p145 = scmp.eq.s32.totalorder %s16, 0
      %p146 = por %p144, %p145
      %p147 = scmp.le.s32.totalorder 1, %s10
      %p148 = scmp.lt.s32.totalorder %s10, 5
      %p149 = pnand %p147, %p148
      %p150 = pneg %p149
      // Predicated region
      $region9: #{gcn_forward.2} parent=5 // pred_check
        _
      $region10: #{gcn_forward.2} parent=5 // pred_check_branch
        %152 = sbr.rel (%p149) target = $region12
      $region11: #{gcn_forward.2} parent=5 // pred_region
        %s153 = ssub.s32 %s10, 1
        // Predicated region
        $region13: #{gcn_forward.2} parent=11 // pred_check
          %p154 = pneg %p71
        $region14: #{gcn_forward.2} parent=11 // pred_check_branch
          %156 = sbr.rel (%p154) target = $region16
        $region15: #{gcn_forward.2} parent=11 // pred_region
          _
        $region16: #{gcn_forward.2} parent=11 // pred_fallthru
          _
        // Predicated region
        $region17: #{gcn_forward.2} parent=11 // pred_check
          %p157 = pneg %p92
        $region18: #{gcn_forward.2} parent=11 // pred_check_branch
          %159 = sbr.rel (%p157) target = $region20
        $region19: #{gcn_forward.2} parent=11 // pred_region
          _
        $region20: #{gcn_forward.2} parent=11 // pred_fallthru
          _
        // Predicated region
        $region21: #{gcn_forward.2} parent=11 // pred_check
          %p160 = pneg %p113
        $region22: #{gcn_forward.2} parent=11 // pred_check_branch
          %162 = sbr.rel (%p160) target = $region24
        $region23: #{gcn_forward.2} parent=11 // pred_region
          _
        $region24: #{gcn_forward.2} parent=11 // pred_fallthru
          _
      $region12: #{gcn_forward.2} parent=5 // pred_fallthru
        _
      %p163 = scmp.lt.s32.totalorder %s10, 4
      // Predicated region
      $region25: #{gcn_forward.2} parent=5 // pred_check
        %p164 = pneg %p163
      $region26: #{gcn_forward.2} parent=5 // pred_check_branch
        %166 = sbr.rel (%p164) target = $region28
      $region27: #{gcn_forward.2} parent=5 // pred_region
        // Predicated region
        $region29: #{gcn_forward.2} parent=27 // pred_check
          %p167 = pneg %p44
        $region30: #{gcn_forward.2} parent=27 // pred_check_branch
          %169 = sbr.rel (%p167) target = $region32
        $region31: #{gcn_forward.2} parent=27 // pred_region
          %s170 = sand.u32 %s34, 1
          %s171 = sand.u32 %s34, 1
          %s172 = smul.addr %s171, 64
          %s173 = scalar_lea.vmem [#allocation3], %s172
          %s174 = smul.u32 16, %s17
          %s175 = smul.addr %s174, 2
          %s176 = sadd.s32 %s18, %s175
          %s177 = smul.addr %s176, 4
          %s178 = scalar_lea.vmem %s0, %s177
          // Predicated region
          $region33: #{gcn_forward.2} parent=31 // pred_check
            _
          $region34: #{gcn_forward.2} parent=31 // pred_check_branch
            %180 = sbr.rel (0) target = $region36
          $region35: #{gcn_forward.2} parent=31 // pred_region
            // Predicated region
            $region37: #{gcn_forward.2} parent=35 // pred_check
              _
            $region38: #{gcn_forward.2} parent=35 // pred_check_branch
              %182 = sbr.rel target = $region40
            $region39: #{gcn_forward.2} parent=35 // pred_region
              // Predicated region
              $region52: #{gcn_forward.2} parent=39 // pred_check
                _
              $region53: #{gcn_forward.2} parent=39 // pred_check_branch
                %228 = sbr.rel (0) target = $region55
              $region54: #{gcn_forward.2} parent=39 // pred_region
                loop: start=0, step=1, limit=1
                $region56: #{gcn_forward.2} parent=54 // loop_pre_header
                  _
                $region57: #{gcn_forward.2} parent=54 // loop_header
                  %s230 = sphi 0, %s234
                  %p231 = scmp.ge.s32.totalorder %s230, 1
                  %s235 = sphi %s178, %s178
                  %s236 = sphi %s173, %s173
                $region58: #{gcn_forward.2} parent=54 // loop_header_branch
                  %233 = sbr.rel (%p231) target = $region62
                $region59: #{gcn_forward.2} parent=54 // loop_body
                  _
                $region60: #{gcn_forward.2} parent=54 // loop_footer
                  %s234 = sadd.s32 1, %s230
                $region61: #{gcn_forward.2} parent=54 // loop_footer_branch
                  %229 = sbr.rel target = $region57
                $region62: #{gcn_forward.2} parent=54 // loop_exit
                  _
                %s238 = ssub.s32 16, 1
                loop: start=0, step=1, limit=1
                $region63: #{gcn_forward.2} parent=54 // loop_pre_header
                  _
                $region64: #{gcn_forward.2} parent=54 // loop_header
                  %s240 = sphi 0, %s244
                  %p241 = scmp.ge.s32.totalorder %s240, 1
                  %s245 = sphi %s178, %s178
                  %s246 = sphi %s173, %s173
                $region65: #{gcn_forward.2} parent=54 // loop_header_branch
                  %243 = sbr.rel (%p241) target = $region69
                $region66: #{gcn_forward.2} parent=54 // loop_body
                  %v247 = vld [vmem:[%s245] sm:%s238]
                  %248 = vst [vmem:[%s246] sm:%s238] %v247
                  %v249 = vld [vmem:[%s245 + $0x8] sm:%s238]
                  %250 = vst [vmem:[%s246 + $0x4] sm:%s238] %v249
                  %v251 = vld [vmem:[%s245 + $0x10] sm:%s238]
                  %252 = vst [vmem:[%s246 + $0x8] sm:%s238] %v251
                  %v253 = vld [vmem:[%s245 + $0x18] sm:%s238]
                  %254 = vst [vmem:[%s246 + $0xc] sm:%s238] %v253
                  %v255 = vld [vmem:[%s245 + $0x20] sm:%s238]
                  %256 = vst [vmem:[%s246 + $0x10] sm:%s238] %v255
                  %v257 = vld [vmem:[%s245 + $0x28] sm:%s238]
                  %258 = vst [vmem:[%s246 + $0x14] sm:%s238] %v257
                  %v259 = vld [vmem:[%s245 + $0x30] sm:%s238]
                  %260 = vst [vmem:[%s246 + $0x18] sm:%s238] %v259
                  %v261 = vld [vmem:[%s245 + $0x38] sm:%s238]
                  %262 = vst [vmem:[%s246 + $0x1c] sm:%s238] %v261
                  %v263 = vld [vmem:[%s245 + $0x40] sm:%s238]
                  %264 = vst [vmem:[%s246 + $0x20] sm:%s238] %v263
                  %v265 = vld [vmem:[%s245 + $0x48] sm:%s238]
                  %266 = vst [vmem:[%s246 + $0x24] sm:%s238] %v265
                  %v267 = vld [vmem:[%s245 + $0x50] sm:%s238]
                  %268 = vst [vmem:[%s246 + $0x28] sm:%s238] %v267
                  %v269 = vld [vmem:[%s245 + $0x58] sm:%s238]
                  %270 = vst [vmem:[%s246 + $0x2c] sm:%s238] %v269
                  %v271 = vld [vmem:[%s245 + $0x60] sm:%s238]
                  %272 = vst [vmem:[%s246 + $0x30] sm:%s238] %v271
                  %v273 = vld [vmem:[%s245 + $0x68] sm:%s238]
                  %274 = vst [vmem:[%s246 + $0x34] sm:%s238] %v273
                  %v275 = vld [vmem:[%s245 + $0x70] sm:%s238]
                  %276 = vst [vmem:[%s246 + $0x38] sm:%s238] %v275
                  %v277 = vld [vmem:[%s245 + $0x78] sm:%s238]
                  %278 = vst [vmem:[%s246 + $0x3c] sm:%s238] %v277
                $region67: #{gcn_forward.2} parent=54 // loop_footer
                  %s244 = sadd.s32 1, %s240
                $region68: #{gcn_forward.2} parent=54 // loop_footer_branch
                  %239 = sbr.rel target = $region64
                $region69: #{gcn_forward.2} parent=54 // loop_exit
                  _
              $region55: #{gcn_forward.2} parent=39 // pred_fallthru
                _
            $region40: #{gcn_forward.2} parent=35 // pred_fallthru
              _
            // Predicated region
            $region41: #{gcn_forward.2} parent=35 // pred_check
              _
            $region42: #{gcn_forward.2} parent=35 // pred_check_branch
              %184 = sbr.rel (0) target = $region44
            $region43: #{gcn_forward.2} parent=35 // pred_region
              %s186 = ssub.s32 16, 1
              loop: start=0, step=1, limit=1
              $region45: #{gcn_forward.2} parent=43 // loop_pre_header
                _
              $region46: #{gcn_forward.2} parent=43 // loop_header
                %s188 = sphi 0, %s192
                %p189 = scmp.ge.s32.totalorder %s188, 1
                %s193 = sphi %s178, %s178
                %s194 = sphi %s173, %s173
              $region47: #{gcn_forward.2} parent=43 // loop_header_branch
                %191 = sbr.rel (%p189) target = $region51
              $region48: #{gcn_forward.2} parent=43 // loop_body
                %v195 = vld [vmem:[%s193] sm:%s186]
                %196 = vst [vmem:[%s194] sm:%s186] %v195
                %v197 = vld [vmem:[%s193 + $0x8] sm:%s186]
                %198 = vst [vmem:[%s194 + $0x4] sm:%s186] %v197
                %v199 = vld [vmem:[%s193 + $0x10] sm:%s186]
                %200 = vst [vmem:[%s194 + $0x8] sm:%s186] %v199
                %v201 = vld [vmem:[%s193 + $0x18] sm:%s186]
                %202 = vst [vmem:[%s194 + $0xc] sm:%s186] %v201
                %v203 = vld [vmem:[%s193 + $0x20] sm:%s186]
                %204 = vst [vmem:[%s194 + $0x10] sm:%s186] %v203
                %v205 = vld [vmem:[%s193 + $0x28] sm:%s186]
                %206 = vst [vmem:[%s194 + $0x14] sm:%s186] %v205
                %v207 = vld [vmem:[%s193 + $0x30] sm:%s186]
                %208 = vst [vmem:[%s194 + $0x18] sm:%s186] %v207
                %v209 = vld [vmem:[%s193 + $0x38] sm:%s186]
                %210 = vst [vmem:[%s194 + $0x1c] sm:%s186] %v209
                %v211 = vld [vmem:[%s193 + $0x40] sm:%s186]
                %212 = vst [vmem:[%s194 + $0x20] sm:%s186] %v211
                %v213 = vld [vmem:[%s193 + $0x48] sm:%s186]
                %214 = vst [vmem:[%s194 + $0x24] sm:%s186] %v213
                %v215 = vld [vmem:[%s193 + $0x50] sm:%s186]
                %216 = vst [vmem:[%s194 + $0x28] sm:%s186] %v215
                %v217 = vld [vmem:[%s193 + $0x58] sm:%s186]
                %218 = vst [vmem:[%s194 + $0x2c] sm:%s186] %v217
                %v219 = vld [vmem:[%s193 + $0x60] sm:%s186]
                %220 = vst [vmem:[%s194 + $0x30] sm:%s186] %v219
                %v221 = vld [vmem:[%s193 + $0x68] sm:%s186]
                %222 = vst [vmem:[%s194 + $0x34] sm:%s186] %v221
                %v223 = vld [vmem:[%s193 + $0x70] sm:%s186]
                %224 = vst [vmem:[%s194 + $0x38] sm:%s186] %v223
                %v225 = vld [vmem:[%s193 + $0x78] sm:%s186]
                %226 = vst [vmem:[%s194 + $0x3c] sm:%s186] %v225
              $region49: #{gcn_forward.2} parent=43 // loop_footer
                %s192 = sadd.s32 1, %s188
              $region50: #{gcn_forward.2} parent=43 // loop_footer_branch
                %187 = sbr.rel target = $region46
              $region51: #{gcn_forward.2} parent=43 // loop_exit
                _
            $region44: #{gcn_forward.2} parent=35 // pred_fallthru
              _
          $region36: #{gcn_forward.2} parent=31 // pred_fallthru
            _
          %279 = vnop
        $region32: #{gcn_forward.2} parent=27 // pred_fallthru
          _
      $region28: #{gcn_forward.2} parent=5 // pred_fallthru
        _
      %p280 = scmp.le.s32.totalorder 1, %s10
      %p281 = scmp.lt.s32.totalorder %s10, 5
      %p282 = pnand %p280, %p281
      %p283 = pneg %p282
      // Predicated region
      $region70: #{gcn_forward.2} parent=5 // pred_check
        _
      $region71: #{gcn_forward.2} parent=5 // pred_check_branch
        %285 = sbr.rel (%p282) target = $region73
      $region72: #{gcn_forward.2} parent=5 // pred_region
        %s286 = ssub.s32 %s10, 1
        %s287 = sand.u32 %s37, 1
        %s288 = sand.u32 %s37, 1
        %s289 = smul.addr %s288, 64
        %s290 = scalar_lea.vmem [#allocation3], %s289
        // Predicated region
        $region74: #{gcn_forward.2} parent=72 // pred_check
          %p291 = pneg %p50
        $region75: #{gcn_forward.2} parent=72 // pred_check_branch
          %293 = sbr.rel (%p291) target = $region77
        $region76: #{gcn_forward.2} parent=72 // pred_region
          _
        $region77: #{gcn_forward.2} parent=72 // pred_fallthru
          _
        %s294 = sand.u32 %s37, 1
        %s295 = sand.u32 %s37, 1
        %s296 = smul.addr %s295, 64
        %s297 = scalar_lea.vmem [#allocation3], %s296
        %p298 = pneg %p50
        %p299 = pneg %p47
        %p300 = pneg %p71
        %p301 = pneg %p68
        %p302 = pneg %p92
        %p303 = pneg %p89
        %p304 = pneg %p113
        %p305 = pneg %p110
        %p306 = pneg %p139
        %p307 = pneg %p136
        %s308 = smul.u32 16, %s19
        %p309 = scmp.lt.s32.totalorder %s308, 31
        %s310 = scalar_select %p309, %s308, 31
        %s311 = smul.addr %s310, 4
        %s312 = scalar_lea.vmem %s4, %s311
        %s313 = smul.u32 16, %s19
        %s314 = smul.u32 16, %s19
        %p315 = scmp.lt.s32.totalorder %s314, 31
        %s316 = scalar_select %p315, %s314, 31
        %s317 = smul.addr %s316, 4
        %s318 = scalar_lea.vmem %s4, %s317
        %s319 = smul.u32 16, %s19
        %p321 = scmp.eq.s32.totalorder %s20, 0
        // Predicated region
        $region78: #{gcn_forward.2} parent=72 // pred_check
          %p322 = pneg %p321
        $region79: #{gcn_forward.2} parent=72 // pred_check_branch
          %324 = sbr.rel (%p322) target = $region81
        $region80: #{gcn_forward.2} parent=72 // pred_region
          %325 = vst [vmem:[#allocation2] sm:$0xff] 0.0
          %326 = vst [vmem:[#allocation2 + $0x8] sm:$0xff] 0.0
          %327 = vst [vmem:[#allocation2 + $0x10] sm:$0xff] 0.0
          %328 = vst [vmem:[#allocation2 + $0x18] sm:$0xff] 0.0
          %329 = vst [vmem:[#allocation2 + $0x20] sm:$0xff] 0.0
          %330 = vst [vmem:[#allocation2 + $0x28] sm:$0xff] 0.0
          %331 = vst [vmem:[#allocation2 + $0x30] sm:$0xff] 0.0
          %332 = vst [vmem:[#allocation2 + $0x38] sm:$0xff] 0.0
          %333 = vst [vmem:[#allocation2 + $0x40] sm:$0xff] 0.0
          %334 = vst [vmem:[#allocation2 + $0x48] sm:$0xff] 0.0
          %335 = vst [vmem:[#allocation2 + $0x50] sm:$0xff] 0.0
          %336 = vst [vmem:[#allocation2 + $0x58] sm:$0xff] 0.0
          %337 = vst [vmem:[#allocation2 + $0x60] sm:$0xff] 0.0
          %338 = vst [vmem:[#allocation2 + $0x68] sm:$0xff] 0.0
          %339 = vst [vmem:[#allocation2 + $0x70] sm:$0xff] 0.0
          %340 = vst [vmem:[#allocation2 + $0x78] sm:$0xff] 0.0
        $region81: #{gcn_forward.2} parent=72 // pred_fallthru
          _
        %s341 = smul.u32 %s20, 128
        %s342 = sshra.s32 %s341, 3
        %s343 = sand.u32 %s341, 7
        %s344 = smul.addr %s342, 4
        %s345 = scalar_lea.vmem %s1, %s344
        %v346 = vld [vmem:[%s345] sm:$0xf]
        %v347 = vld [vmem:[%s345 + $0x4] sm:$0xf]
        %v348 = vld [vmem:[%s345 + $0x8] sm:$0xf]
        %v349 = vld [vmem:[%s345 + $0xc] sm:$0xf]
        %v350 = vld [vmem:[%s345 + $0x10] sm:$0xf]
        %v351 = vld [vmem:[%s345 + $0x14] sm:$0xf]
        %v352 = vld [vmem:[%s345 + $0x18] sm:$0xf]
        %v353 = vld [vmem:[%s345 + $0x1c] sm:$0xf]
        %v354 = vld [vmem:[%s345 + $0x20] sm:$0xf]
        %v355 = vld [vmem:[%s345 + $0x24] sm:$0xf]
        %v356 = vld [vmem:[%s345 + $0x28] sm:$0xf]
        %v357 = vld [vmem:[%s345 + $0x2c] sm:$0xf]
        %v358 = vld [vmem:[%s345 + $0x30] sm:$0xf]
        %v359 = vld [vmem:[%s345 + $0x34] sm:$0xf]
        %v360 = vld [vmem:[%s345 + $0x38] sm:$0xf]
        %v361 = vld [vmem:[%s345 + $0x3c] sm:$0xf]
        %v362 = vld [vmem:[#allocation2] sm:$0xff]
        %v363 = vld [vmem:[#allocation2 + $0x8] sm:$0xff]
        %v364 = vld [vmem:[#allocation2 + $0x10] sm:$0xff]
        %v365 = vld [vmem:[#allocation2 + $0x18] sm:$0xff]
        %v366 = vld [vmem:[#allocation2 + $0x20] sm:$0xff]
        %v367 = vld [vmem:[#allocation2 + $0x28] sm:$0xff]
        %v368 = vld [vmem:[#allocation2 + $0x30] sm:$0xff]
        %v369 = vld [vmem:[#allocation2 + $0x38] sm:$0xff]
        %v370 = vld [vmem:[#allocation2 + $0x40] sm:$0xff]
        %v371 = vld [vmem:[#allocation2 + $0x48] sm:$0xff]
        %v372 = vld [vmem:[#allocation2 + $0x50] sm:$0xff]
        %v373 = vld [vmem:[#allocation2 + $0x58] sm:$0xff]
        %v374 = vld [vmem:[#allocation2 + $0x60] sm:$0xff]
        %v375 = vld [vmem:[#allocation2 + $0x68] sm:$0xff]
        %v376 = vld [vmem:[#allocation2 + $0x70] sm:$0xff]
        %v377 = vld [vmem:[#allocation2 + $0x78] sm:$0xff]
        %v378 = vld [vmem:[%s290] sm:$0xf]
        %v379 = vld [vmem:[%s290 + $0x4] sm:$0xf]
        %v380 = vld [vmem:[%s290 + $0x8] sm:$0xf]
        %v381 = vld [vmem:[%s290 + $0xc] sm:$0xf]
        %v382 = vld [vmem:[%s290 + $0x10] sm:$0xf]
        %v383 = vld [vmem:[%s290 + $0x14] sm:$0xf]
        %v384 = vld [vmem:[%s290 + $0x18] sm:$0xf]
        %v385 = vld [vmem:[%s290 + $0x1c] sm:$0xf]
        %v386 = vld [vmem:[%s290 + $0x20] sm:$0xf]
        %v387 = vld [vmem:[%s290 + $0x24] sm:$0xf]
        %v388 = vld [vmem:[%s290 + $0x28] sm:$0xf]
        %v389 = vld [vmem:[%s290 + $0x2c] sm:$0xf]
        %v390 = vld [vmem:[%s290 + $0x30] sm:$0xf]
        %v391 = vld [vmem:[%s290 + $0x34] sm:$0xf]
        %v392 = vld [vmem:[%s290 + $0x38] sm:$0xf]
        %v393 = vld [vmem:[%s290 + $0x3c] sm:$0xf]
        %v410 = vunpack.c.l.b16 %v378
        %v411 = vunpack.c.l.b16 %v379
        %v412 = vunpack.c.l.b16 %v380
        %v413 = vunpack.c.l.b16 %v381
        %v414 = vunpack.c.l.b16 %v382
        %v415 = vunpack.c.l.b16 %v383
        %v416 = vunpack.c.l.b16 %v384
        %v417 = vunpack.c.l.b16 %v385
        %v418 = vunpack.c.l.b16 %v386
        %v419 = vunpack.c.l.b16 %v387
        %v420 = vunpack.c.l.b16 %v388
        %v421 = vunpack.c.l.b16 %v389
        %v422 = vunpack.c.l.b16 %v390
        %v423 = vunpack.c.l.b16 %v391
        %v424 = vunpack.c.l.b16 %v392
        %v425 = vunpack.c.l.b16 %v393
        %v426 = vpack.c.b16 %v411, %v410
        %v427 = vpack.c.b16 %v413, %v412
        %v428 = vpack.c.b16 %v415, %v414
        %v429 = vpack.c.b16 %v417, %v416
        %v430 = vpack.c.b16 %v419, %v418
        %v431 = vpack.c.b16 %v421, %v420
        %v432 = vpack.c.b16 %v423, %v422
        %v433 = vpack.c.b16 %v425, %v424
        %v458 = vunpack.c.l.b16 %v346
        %v459 = vunpack.c.l.b16 %v347
        %v460 = vunpack.c.l.b16 %v348
        %v461 = vunpack.c.l.b16 %v349
        %v462 = vunpack.c.l.b16 %v350
        %v463 = vunpack.c.l.b16 %v351
        %v464 = vunpack.c.l.b16 %v352
        %v465 = vunpack.c.l.b16 %v353
        %v466 = vunpack.c.l.b16 %v354
        %v467 = vunpack.c.l.b16 %v355
        %v468 = vunpack.c.l.b16 %v356
        %v469 = vunpack.c.l.b16 %v357
        %v470 = vunpack.c.l.b16 %v358
        %v471 = vunpack.c.l.b16 %v359
        %v472 = vunpack.c.l.b16 %v360
        %v473 = vunpack.c.l.b16 %v361
        %v474 = vpack.c.b16 %v459, %v458
        %v475 = vpack.c.b16 %v461, %v460
        %v476 = vpack.c.b16 %v463, %v462
        %v477 = vpack.c.b16 %v465, %v464
        %v478 = vpack.c.b16 %v467, %v466
        %v479 = vpack.c.b16 %v469, %v468
        %v480 = vpack.c.b16 %v471, %v470
        %v481 = vpack.c.b16 %v473, %v472
        %490 = vmatprep.subr.bf16.mxu0 0
        %491 = vmatpush1.bf16.msra.mxu0 %v481
        %492 = vmatprep.subr.bf16.mxu0 0
        %493 = vmatpush1.bf16.msra.mxu0 %v480
        %494 = vmatprep.subr.bf16.mxu0 0
        %495 = vmatpush1.bf16.msra.mxu0 %v479
        %496 = vmatprep.subr.bf16.mxu0 0
        %497 = vmatpush1.bf16.msra.mxu0 %v478
        %498 = vmatprep.subr.bf16.mxu0 0
        %499 = vmatpush1.bf16.msra.mxu0 %v477
        %500 = vmatprep.subr.bf16.mxu0 0
        %501 = vmatpush1.bf16.msra.mxu0 %v476
        %502 = vmatprep.subr.bf16.mxu0 0
        %503 = vmatpush1.bf16.msra.mxu0 %v475
        %504 = vmatprep.subr.bf16.mxu0 0
        %505 = vmatpush1.bf16.msra.mxu0 %v474
        %506 = vmatprep.subr.bf16.mxu0 0
        %507 = vmatpush2.bf16.msra.mxu0 0
        %508 = vmatprep.subr.bf16.mxu0 0
        %509 = vmatpush2.bf16.msra.mxu0 0
        %510 = vmatprep.subr.bf16.mxu0 0
        %511 = vmatpush2.bf16.msra.mxu0 0
        %512 = vmatprep.subr.bf16.mxu0 0
        %513 = vmatpush2.bf16.msra.mxu0 0
        %514 = vmatprep.subr.bf16.mxu0 0
        %515 = vmatpush2.bf16.msra.mxu0 0
        %516 = vmatprep.subr.bf16.mxu0 0
        %517 = vmatpush2.bf16.msra.mxu0 0
        %518 = vmatprep.subr.bf16.mxu0 0
        %519 = vmatpush2.bf16.msra.mxu0 0
        %520 = vmatprep.subr.bf16.mxu0 0
        %521 = vmatpush2.bf16.msra.mxu0 0
        %522 = vmatprep.mubr.bf16.mxu0 0
        %523 = vmatmul.mubr.bf16.gmra.mxu0 %v426
        %v524 = vpop.f32.mrf.mxu0
        %v525 = vadd.f32 0.0, %v524
        %v526 = vpop.f32.mrf.mxu0
        %v527 = vpop.f32.mrf.mxu0
        %v528 = vadd.f32 0.0, %v527
        %v529 = vpop.f32.mrf.mxu0
        %530 = vmatprep.mubr.bf16.mxu0 0
        %531 = vmatmul.mubr.bf16.gmra.mxu0 %v427
        %v532 = vpop.f32.mrf.mxu0
        %v533 = vadd.f32 0.0, %v532
        %v534 = vpop.f32.mrf.mxu0
        %v535 = vpop.f32.mrf.mxu0
        %v536 = vadd.f32 0.0, %v535
        %v537 = vpop.f32.mrf.mxu0
        %538 = vmatprep.mubr.bf16.mxu0 0
        %539 = vmatmul.mubr.bf16.gmra.mxu0 %v428
        %v540 = vpop.f32.mrf.mxu0
        %v541 = vadd.f32 0.0, %v540
        %v542 = vpop.f32.mrf.mxu0
        %v543 = vpop.f32.mrf.mxu0
        %v544 = vadd.f32 0.0, %v543
        %v545 = vpop.f32.mrf.mxu0
        %546 = vmatprep.mubr.bf16.mxu0 0
        %547 = vmatmul.mubr.bf16.gmra.mxu0 %v429
        %v548 = vpop.f32.mrf.mxu0
        %v549 = vadd.f32 0.0, %v548
        %v550 = vpop.f32.mrf.mxu0
        %v551 = vpop.f32.mrf.mxu0
        %v552 = vadd.f32 0.0, %v551
        %v553 = vpop.f32.mrf.mxu0
        %554 = vmatprep.mubr.bf16.mxu0 0
        %555 = vmatmul.mubr.bf16.gmra.mxu0 %v430
        %v556 = vpop.f32.mrf.mxu0
        %v557 = vadd.f32 0.0, %v556
        %v558 = vpop.f32.mrf.mxu0
        %v559 = vpop.f32.mrf.mxu0
        %v560 = vadd.f32 0.0, %v559
        %v561 = vpop.f32.mrf.mxu0
        %562 = vmatprep.mubr.bf16.mxu0 0
        %563 = vmatmul.mubr.bf16.gmra.mxu0 %v431
        %v564 = vpop.f32.mrf.mxu0
        %v565 = vadd.f32 0.0, %v564
        %v566 = vpop.f32.mrf.mxu0
        %v567 = vpop.f32.mrf.mxu0
        %v568 = vadd.f32 0.0, %v567
        %v569 = vpop.f32.mrf.mxu0
        %570 = vmatprep.mubr.bf16.mxu0 0
        %571 = vmatmul.mubr.bf16.gmra.mxu0 %v432
        %v572 = vpop.f32.mrf.mxu0
        %v573 = vadd.f32 0.0, %v572
        %v574 = vpop.f32.mrf.mxu0
        %v575 = vpop.f32.mrf.mxu0
        %v576 = vadd.f32 0.0, %v575
        %v577 = vpop.f32.mrf.mxu0
        %578 = vmatprep.mubr.bf16.mxu0 0
        %579 = vmatmul.mubr.bf16.gmra.mxu0 %v433
        %v580 = vpop.f32.mrf.mxu0
        %v581 = vadd.f32 0.0, %v580
        %v582 = vpop.f32.mrf.mxu0
        %v583 = vpop.f32.mrf.mxu0
        %v584 = vadd.f32 0.0, %v583
        %v585 = vpop.f32.mrf.mxu0
        %586 = vdwg.mxu0
        %v587 = vadd.f32 %v362, %v525
        %v588 = vadd.f32 %v363, %v528
        %v589 = vadd.f32 %v364, %v533
        %v590 = vadd.f32 %v365, %v536
        %v591 = vadd.f32 %v366, %v541
        %v592 = vadd.f32 %v367, %v544
        %v593 = vadd.f32 %v368, %v549
        %v594 = vadd.f32 %v369, %v552
        %v595 = vadd.f32 %v370, %v557
        %v596 = vadd.f32 %v371, %v560
        %v597 = vadd.f32 %v372, %v565
        %v598 = vadd.f32 %v373, %v568
        %v599 = vadd.f32 %v374, %v573
        %v600 = vadd.f32 %v375, %v576
        %v601 = vadd.f32 %v376, %v581
        %v602 = vadd.f32 %v377, %v584
        %603 = vst [vmem:[#allocation2] sm:$0xff] %v587
        %604 = vst [vmem:[#allocation2 + $0x8] sm:$0xff] %v588
        %605 = vst [vmem:[#allocation2 + $0x10] sm:$0xff] %v589
        %606 = vst [vmem:[#allocation2 + $0x18] sm:$0xff] %v590
        %607 = vst [vmem:[#allocation2 + $0x20] sm:$0xff] %v591
        %608 = vst [vmem:[#allocation2 + $0x28] sm:$0xff] %v592
        %609 = vst [vmem:[#allocation2 + $0x30] sm:$0xff] %v593
        %610 = vst [vmem:[#allocation2 + $0x38] sm:$0xff] %v594
        %611 = vst [vmem:[#allocation2 + $0x40] sm:$0xff] %v595
        %612 = vst [vmem:[#allocation2 + $0x48] sm:$0xff] %v596
        %613 = vst [vmem:[#allocation2 + $0x50] sm:$0xff] %v597
        %614 = vst [vmem:[#allocation2 + $0x58] sm:$0xff] %v598
        %615 = vst [vmem:[#allocation2 + $0x60] sm:$0xff] %v599
        %616 = vst [vmem:[#allocation2 + $0x68] sm:$0xff] %v600
        %617 = vst [vmem:[#allocation2 + $0x70] sm:$0xff] %v601
        %618 = vst [vmem:[#allocation2 + $0x78] sm:$0xff] %v602
        %p619 = scmp.eq.s32.totalorder %s20, 1
        // Predicated region
        $region82: #{gcn_forward.2} parent=72 // pred_check
          %p620 = pneg %p619
        $region83: #{gcn_forward.2} parent=72 // pred_check_branch
          %622 = sbr.rel (%p620) target = $region85
        $region84: #{gcn_forward.2} parent=72 // pred_region
          %v623 = vld [vmem:[#allocation2] sm:$0xff]
          %v624 = vld [vmem:[#allocation2 + $0x8] sm:$0xff]
          %v625 = vld [vmem:[#allocation2 + $0x10] sm:$0xff]
          %v626 = vld [vmem:[#allocation2 + $0x18] sm:$0xff]
          %v627 = vld [vmem:[#allocation2 + $0x20] sm:$0xff]
          %v628 = vld [vmem:[#allocation2 + $0x28] sm:$0xff]
          %v629 = vld [vmem:[#allocation2 + $0x30] sm:$0xff]
          %v630 = vld [vmem:[#allocation2 + $0x38] sm:$0xff]
          %v631 = vld [vmem:[#allocation2 + $0x40] sm:$0xff]
          %v632 = vld [vmem:[#allocation2 + $0x48] sm:$0xff]
          %v633 = vld [vmem:[#allocation2 + $0x50] sm:$0xff]
          %v634 = vld [vmem:[#allocation2 + $0x58] sm:$0xff]
          %v635 = vld [vmem:[#allocation2 + $0x60] sm:$0xff]
          %v636 = vld [vmem:[#allocation2 + $0x68] sm:$0xff]
          %v637 = vld [vmem:[#allocation2 + $0x70] sm:$0xff]
          %v638 = vld [vmem:[#allocation2 + $0x78] sm:$0xff]
          %v639 = vld [vmem:[%s2] sm:$0x1]
          %v641 = vlaneseq
          %v642 = vshrl.u32 %v641, 7
          %v643 = vsub.s32 0, %v642
          %v644 = vrot.slane %v639, %v643
          %v646 = vadd.f32 %v623, %v644
          %v647 = vadd.f32 %v624, %v644
          %v648 = vadd.f32 %v625, %v644
          %v649 = vadd.f32 %v626, %v644
          %v650 = vadd.f32 %v627, %v644
          %v651 = vadd.f32 %v628, %v644
          %v652 = vadd.f32 %v629, %v644
          %v653 = vadd.f32 %v630, %v644
          %v654 = vadd.f32 %v631, %v644
          %v655 = vadd.f32 %v632, %v644
          %v656 = vadd.f32 %v633, %v644
          %v657 = vadd.f32 %v634, %v644
          %v658 = vadd.f32 %v635, %v644
          %v659 = vadd.f32 %v636, %v644
          %v660 = vadd.f32 %v637, %v644
          %v661 = vadd.f32 %v638, %v644
          %v662 = vmax.f32 %v646, 0.0
          %v663 = vmax.f32 %v647, 0.0
          %v664 = vmax.f32 %v648, 0.0
          %v665 = vmax.f32 %v649, 0.0
          %v666 = vmax.f32 %v650, 0.0
          %v667 = vmax.f32 %v651, 0.0
          %v668 = vmax.f32 %v652, 0.0
          %v669 = vmax.f32 %v653, 0.0
          %v670 = vmax.f32 %v654, 0.0
          %v671 = vmax.f32 %v655, 0.0
          %v672 = vmax.f32 %v656, 0.0
          %v673 = vmax.f32 %v657, 0.0
          %v674 = vmax.f32 %v658, 0.0
          %v675 = vmax.f32 %v659, 0.0
          %v676 = vmax.f32 %v660, 0.0
          %v677 = vmax.f32 %v661, 0.0
          %v678 = vpack.c.bf16 %v663, %v662
          %v679 = vpack.c.bf16 %v665, %v664
          %v680 = vpack.c.bf16 %v667, %v666
          %v681 = vpack.c.bf16 %v669, %v668
          %v682 = vpack.c.bf16 %v671, %v670
          %v683 = vpack.c.bf16 %v673, %v672
          %v684 = vpack.c.bf16 %v675, %v674
          %v685 = vpack.c.bf16 %v677, %v676
          %v686 = vld [vmem:[%s3] sm:$0xf]
          %v687 = vld [vmem:[%s3 + $0x4] sm:$0xf]
          %v688 = vld [vmem:[%s3 + $0x8] sm:$0xf]
          %v689 = vld [vmem:[%s3 + $0xc] sm:$0xf]
          %v690 = vld [vmem:[%s3 + $0x10] sm:$0xf]
          %v691 = vld [vmem:[%s3 + $0x14] sm:$0xf]
          %v692 = vld [vmem:[%s3 + $0x18] sm:$0xf]
          %v693 = vld [vmem:[%s3 + $0x1c] sm:$0xf]
          %v694 = vld [vmem:[%s3 + $0x20] sm:$0xf]
          %v695 = vld [vmem:[%s3 + $0x24] sm:$0xf]
          %v696 = vld [vmem:[%s3 + $0x28] sm:$0xf]
          %v697 = vld [vmem:[%s3 + $0x2c] sm:$0xf]
          %v698 = vld [vmem:[%s3 + $0x30] sm:$0xf]
          %v699 = vld [vmem:[%s3 + $0x34] sm:$0xf]
          %v700 = vld [vmem:[%s3 + $0x38] sm:$0xf]
          %v701 = vld [vmem:[%s3 + $0x3c] sm:$0xf]
          %v718 = vunpack.c.l.b16 %v686
          %v719 = vunpack.c.l.b16 %v687
          %v720 = vunpack.c.l.b16 %v688
          %v721 = vunpack.c.l.b16 %v689
          %v722 = vunpack.c.l.b16 %v690
          %v723 = vunpack.c.l.b16 %v691
          %v724 = vunpack.c.l.b16 %v692
          %v725 = vunpack.c.l.b16 %v693
          %v726 = vunpack.c.l.b16 %v694
          %v727 = vunpack.c.l.b16 %v695
          %v728 = vunpack.c.l.b16 %v696
          %v729 = vunpack.c.l.b16 %v697
          %v730 = vunpack.c.l.b16 %v698
          %v731 = vunpack.c.l.b16 %v699
          %v732 = vunpack.c.l.b16 %v700
          %v733 = vunpack.c.l.b16 %v701
          %v734 = vpack.c.b16 %v719, %v718
          %v735 = vpack.c.b16 %v721, %v720
          %v736 = vpack.c.b16 %v723, %v722
          %v737 = vpack.c.b16 %v725, %v724
          %v738 = vpack.c.b16 %v727, %v726
          %v739 = vpack.c.b16 %v729, %v728
          %v740 = vpack.c.b16 %v731, %v730
          %v741 = vpack.c.b16 %v733, %v732
          %750 = vmatprep.subr.bf16.mxu0 0
          %751 = vmatpush1.bf16.msra.mxu0 %v741
          %752 = vmatprep.subr.bf16.mxu0 0
          %753 = vmatpush1.bf16.msra.mxu0 %v740
          %754 = vmatprep.subr.bf16.mxu0 0
          %755 = vmatpush1.bf16.msra.mxu0 %v739
          %756 = vmatprep.subr.bf16.mxu0 0
          %757 = vmatpush1.bf16.msra.mxu0 %v738
          %758 = vmatprep.subr.bf16.mxu0 0
          %759 = vmatpush1.bf16.msra.mxu0 %v737
          %760 = vmatprep.subr.bf16.mxu0 0
          %761 = vmatpush1.bf16.msra.mxu0 %v736
          %762 = vmatprep.subr.bf16.mxu0 0
          %763 = vmatpush1.bf16.msra.mxu0 %v735
          %764 = vmatprep.subr.bf16.mxu0 0
          %765 = vmatpush1.bf16.msra.mxu0 %v734
          %766 = vmatprep.subr.bf16.mxu0 0
          %767 = vmatpush2.bf16.msra.mxu0 0
          %768 = vmatprep.subr.bf16.mxu0 0
          %769 = vmatpush2.bf16.msra.mxu0 0
          %770 = vmatprep.subr.bf16.mxu0 0
          %771 = vmatpush2.bf16.msra.mxu0 0
          %772 = vmatprep.subr.bf16.mxu0 0
          %773 = vmatpush2.bf16.msra.mxu0 0
          %774 = vmatprep.subr.bf16.mxu0 0
          %775 = vmatpush2.bf16.msra.mxu0 0
          %776 = vmatprep.subr.bf16.mxu0 0
          %777 = vmatpush2.bf16.msra.mxu0 0
          %778 = vmatprep.subr.bf16.mxu0 0
          %779 = vmatpush2.bf16.msra.mxu0 0
          %780 = vmatprep.subr.bf16.mxu0 0
          %781 = vmatpush2.bf16.msra.mxu0 0
          %782 = vmatprep.mubr.bf16.mxu0 0
          %783 = vmatmul.mubr.bf16.gmra.mxu0 %v678
          %v784 = vpop.f32.mrf.mxu0
          %v785 = vadd.f32 0.0, %v784
          %v786 = vpop.f32.mrf.mxu0
          %v787 = vpop.f32.mrf.mxu0
          %v788 = vadd.f32 0.0, %v787
          %v789 = vpop.f32.mrf.mxu0
          %790 = vmatprep.mubr.bf16.mxu0 0
          %791 = vmatmul.mubr.bf16.gmra.mxu0 %v679
          %v792 = vpop.f32.mrf.mxu0
          %v793 = vadd.f32 0.0, %v792
          %v794 = vpop.f32.mrf.mxu0
          %v795 = vpop.f32.mrf.mxu0
          %v796 = vadd.f32 0.0, %v795
          %v797 = vpop.f32.mrf.mxu0
          %798 = vmatprep.mubr.bf16.mxu0 0
          %799 = vmatmul.mubr.bf16.gmra.mxu0 %v680
          %v800 = vpop.f32.mrf.mxu0
          %v801 = vadd.f32 0.0, %v800
          %v802 = vpop.f32.mrf.mxu0
          %v803 = vpop.f32.mrf.mxu0
          %v804 = vadd.f32 0.0, %v803
          %v805 = vpop.f32.mrf.mxu0
          %806 = vmatprep.mubr.bf16.mxu0 0
          %807 = vmatmul.mubr.bf16.gmra.mxu0 %v681
          %v808 = vpop.f32.mrf.mxu0
          %v809 = vadd.f32 0.0, %v808
          %v810 = vpop.f32.mrf.mxu0
          %v811 = vpop.f32.mrf.mxu0
          %v812 = vadd.f32 0.0, %v811
          %v813 = vpop.f32.mrf.mxu0
          %814 = vmatprep.mubr.bf16.mxu0 0
          %815 = vmatmul.mubr.bf16.gmra.mxu0 %v682
          %v816 = vpop.f32.mrf.mxu0
          %v817 = vadd.f32 0.0, %v816
          %v818 = vpop.f32.mrf.mxu0
          %v819 = vpop.f32.mrf.mxu0
          %v820 = vadd.f32 0.0, %v819
          %v821 = vpop.f32.mrf.mxu0
          %822 = vmatprep.mubr.bf16.mxu0 0
          %823 = vmatmul.mubr.bf16.gmra.mxu0 %v683
          %v824 = vpop.f32.mrf.mxu0
          %v825 = vadd.f32 0.0, %v824
          %v826 = vpop.f32.mrf.mxu0
          %v827 = vpop.f32.mrf.mxu0
          %v828 = vadd.f32 0.0, %v827
          %v829 = vpop.f32.mrf.mxu0
          %830 = vmatprep.mubr.bf16.mxu0 0
          %831 = vmatmul.mubr.bf16.gmra.mxu0 %v684
          %v832 = vpop.f32.mrf.mxu0
          %v833 = vadd.f32 0.0, %v832
          %v834 = vpop.f32.mrf.mxu0
          %v835 = vpop.f32.mrf.mxu0
          %v836 = vadd.f32 0.0, %v835
          %v837 = vpop.f32.mrf.mxu0
          %838 = vmatprep.mubr.bf16.mxu0 0
          %839 = vmatmul.mubr.bf16.gmra.mxu0 %v685
          %v840 = vpop.f32.mrf.mxu0
          %v841 = vadd.f32 0.0, %v840
          %v842 = vpop.f32.mrf.mxu0
          %v843 = vpop.f32.mrf.mxu0
          %v844 = vadd.f32 0.0, %v843
          %v845 = vpop.f32.mrf.mxu0
          %846 = vdwg.mxu0
          %v847 = vpack.c.bf16 %v788, %v785
          %v848 = vpack.c.bf16 %v796, %v793
          %v849 = vpack.c.bf16 %v804, %v801
          %v850 = vpack.c.bf16 %v812, %v809
          %v851 = vpack.c.bf16 %v820, %v817
          %v852 = vpack.c.bf16 %v828, %v825
          %v853 = vpack.c.bf16 %v836, %v833
          %v854 = vpack.c.bf16 %v844, %v841
          %v863 = vunpack.c.l.b16 %v847
          %v864 = vunpack.c.h.b16 %v847
          %v865 = vunpack.c.l.b16 %v848
          %v866 = vunpack.c.h.b16 %v848
          %v867 = vunpack.c.l.b16 %v849
          %v868 = vunpack.c.h.b16 %v849
          %v869 = vunpack.c.l.b16 %v850
          %v870 = vunpack.c.h.b16 %v850
          %v871 = vunpack.c.l.b16 %v851
          %v872 = vunpack.c.h.b16 %v851
          %v873 = vunpack.c.l.b16 %v852
          %v874 = vunpack.c.h.b16 %v852
          %v875 = vunpack.c.l.b16 %v853
          %v876 = vunpack.c.h.b16 %v853
          %v877 = vunpack.c.l.b16 %v854
          %v878 = vunpack.c.h.b16 %v854
          %v879 = vpack.c.b16 %v863, %v863
          %v880 = vpack.c.b16 %v864, %v864
          %v881 = vpack.c.b16 %v865, %v865
          %v882 = vpack.c.b16 %v866, %v866
          %v883 = vpack.c.b16 %v867, %v867
          %v884 = vpack.c.b16 %v868, %v868
          %v885 = vpack.c.b16 %v869, %v869
          %v886 = vpack.c.b16 %v870, %v870
          %v887 = vpack.c.b16 %v871, %v871
          %v888 = vpack.c.b16 %v872, %v872
          %v889 = vpack.c.b16 %v873, %v873
          %v890 = vpack.c.b16 %v874, %v874
          %v891 = vpack.c.b16 %v875, %v875
          %v892 = vpack.c.b16 %v876, %v876
          %v893 = vpack.c.b16 %v877, %v877
          %v894 = vpack.c.b16 %v878, %v878
          %911 = vst [vmem:[%s318] sm:$0xf] %v879
          %912 = vst [vmem:[%s318 + $0x4] sm:$0xf] %v880
          %913 = vst [vmem:[%s318 + $0x8] sm:$0xf] %v881
          %914 = vst [vmem:[%s318 + $0xc] sm:$0xf] %v882
          %915 = vst [vmem:[%s318 + $0x10] sm:$0xf] %v883
          %916 = vst [vmem:[%s318 + $0x14] sm:$0xf] %v884
          %917 = vst [vmem:[%s318 + $0x18] sm:$0xf] %v885
          %918 = vst [vmem:[%s318 + $0x1c] sm:$0xf] %v886
          %919 = vst [vmem:[%s318 + $0x20] sm:$0xf] %v887
          %920 = vst [vmem:[%s318 + $0x24] sm:$0xf] %v888
          %921 = vst [vmem:[%s318 + $0x28] sm:$0xf] %v889
          %922 = vst [vmem:[%s318 + $0x2c] sm:$0xf] %v890
          %923 = vst [vmem:[%s318 + $0x30] sm:$0xf] %v891
          %924 = vst [vmem:[%s318 + $0x34] sm:$0xf] %v892
          %925 = vst [vmem:[%s318 + $0x38] sm:$0xf] %v893
          %926 = vst [vmem:[%s318 + $0x3c] sm:$0xf] %v894
        $region85: #{gcn_forward.2} parent=72 // pred_fallthru
          _
        %s927 = smul.u32 16, %s19
        %p928 = scmp.lt.s32.totalorder %s927, 31
        %s929 = scalar_select %p928, %s927, 31
        %s930 = smul.addr %s929, 4
        %s931 = scalar_lea.vmem %s4, %s930
        // Predicated region
        $region86: #{gcn_forward.2} parent=72 // pred_check
          %p932 = pneg %p136
        $region87: #{gcn_forward.2} parent=72 // pred_check_branch
          %934 = sbr.rel (%p932) target = $region89
        $region88: #{gcn_forward.2} parent=72 // pred_region
          %s935 = smul.u32 16, %s19
        $region89: #{gcn_forward.2} parent=72 // pred_fallthru
          _
      $region73: #{gcn_forward.2} parent=5 // pred_fallthru
        _
      %p936 = scmp.le.s32.totalorder 2, %s10
      // Predicated region
      $region90: #{gcn_forward.2} parent=5 // pred_check
        %p937 = pneg %p936
      $region91: #{gcn_forward.2} parent=5 // pred_check_branch
        %939 = sbr.rel (%p937) target = $region93
      $region92: #{gcn_forward.2} parent=5 // pred_region
        %s940 = ssub.s32 %s10, 2
        // Predicated region
        $region94: #{gcn_forward.2} parent=92 // pred_check
          %p941 = pneg %p142
        $region95: #{gcn_forward.2} parent=92 // pred_check_branch
          %943 = sbr.rel (%p941) target = $region97
        $region96: #{gcn_forward.2} parent=92 // pred_region
          %s944 = smul.u32 16, %s21
          %p945 = scmp.lt.s32.totalorder %s944, 31
          %s946 = scalar_select %p945, %s944, 31
          %s947 = smul.addr %s946, 4
          %s948 = scalar_lea.vmem %s4, %s947
        $region97: #{gcn_forward.2} parent=92 // pred_fallthru
          _
      $region93: #{gcn_forward.2} parent=5 // pred_fallthru
        _
    $region6: #{gcn_forward.2} parent=1 // loop_footer
      %s14 = sadd.s32 1, %s10
    $region7: #{gcn_forward.2} parent=1 // loop_footer_branch
      %9 = sbr.rel target = $region3
    $region8: #{gcn_forward.2} parent=1 // loop_exit
      _

// kernel: gcn_forward.3
$region0: #{gcn_forward.3}
  #allocation0 [shape = 'u32[]', space=smem, size = 0x4, offset = 0x4, fixed_abs, tag = 'smem constant byte address 0x4 - core index']
  #allocation1 [shape = 'u32[144,128]{1,0:T(1,128)}', space=vmem, size = 0x12000, scoped, tag = 'internal scratch']
  #allocation2 [shape = 'f32[128,128]{1,0:T(8,128)}', space=vmem, size = 0x10000, scoped, tag = 'scratch operand']
  %s0 = inlined_call_operand.vmem [shape: bf16[256,256], index: 0, kind: input, shape index: {}]
  %s1 = inlined_call_operand.vmem [shape: bf16[256,128], index: 1, kind: input, shape index: {}]
  %s2 = inlined_call_operand.vmem [shape: f32[1,128], index: 2, kind: input, shape index: {}]
  %s3 = inlined_call_operand.vmem [shape: f32[256,128], index: 3, kind: output, shape index: {}]
  %s4 = sld [smem:[#allocation0]]
  $region94: #{gcn_forward.3} parent=0
    _
  %s6 = ssub.s32 1, %s4
  %s7 = scalar_select 0, %s6, %s4
  $region1: #{gcn_forward.3} parent=0
    #allocation3 [shape = 'u8[65536]{0}', space=vmem, size = 0x10000, scoped, tag = 'input window, operand 0']
    loop: start=0, step=1, limit=6
    $region2: #{gcn_forward.3} parent=1 // loop_pre_header
      _
    $region3: #{gcn_forward.3} parent=1 // loop_header
      %s9 = sphi 0, %s13
      %p10 = scmp.ge.s32.totalorder %s9, 6
      %s16 = sphi 0, %s28
      %s17 = sphi 0, %s24
      %s18 = sphi 0, %s16
      %s19 = sphi 0, %s17
      %s20 = sphi 0, %s18
      %s21 = sphi 0, %s19
      %s33 = sphi 0, %s35
      %s36 = sphi 0, %s33
      %s37 = sphi 0, %s36
      %s53 = sphi 0, %s37
      %s57 = sphi 0, %s57
      %s59 = sphi 0, %s57
      %s60 = sphi 0, %s59
      %s74 = sphi 0, %s60
      %s78 = sphi 0, %s78
      %s80 = sphi 0, %s78
      %s81 = sphi 0, %s80
      %s95 = sphi 0, %s81
      %s101 = sphi 0, %s103
      %s104 = sphi 0, %s101
      %s105 = sphi 0, %s104
      %s121 = sphi 0, %s105
    $region4: #{gcn_forward.3} parent=1 // loop_header_branch
      %12 = sbr.rel (%p10) target = $region8
    $region5: #{gcn_forward.3} parent=1 // loop_body
      %s14 = ssub.s32 %s9, 1
      %s15 = ssub.s32 %s9, 2
      %s22 = sadd.s32 1, %s17
      %p23 = scmp.ge.s32.totalorder %s22, 2
      %s24 = scalar_select %p23, 0, %s22
      %s25 = sadd.s32 1, %s16
      %s26 = scalar_select %p23, %s25, %s16
      %p27 = scmp.ge.s32.totalorder %s26, 2
      %s28 = scalar_select %p27, 0, %s26
      %s29 = ssub.s32 %s16, %s28
      %s30 = ssub.s32 %s17, %s24
      %s31 = sor.u32 %s29, %s30
      %p32 = scmp.eq.s32.totalorder %s31, 0
      %s34 = sadd.s32 %s33, 1
      %s35 = scalar_select %p32, %s33, %s34
      %p38 = pneg %p32
      %p39 = scmp.eq.s32.totalorder %s9, 3
      %p40 = por %p38, %p39
      %p41 = scmp.ne.s32.totalorder %s33, %s36
      %p42 = scmp.eq.s32.totalorder %s9, 0
      %p43 = por %p41, %p42
      %p44 = scmp.ne.s32.totalorder %s33, %s36
      %p45 = scmp.eq.s32.totalorder %s14, 3
      %p46 = por %p44, %p45
      %p47 = scmp.ne.s32.totalorder %s36, %s37
      %p48 = scmp.eq.s32.totalorder %s14, 0
      %p49 = por %p47, %p48
      %p50 = scmp.ne.s32.totalorder %s36, %s37
      %p51 = scmp.eq.s32.totalorder %s15, 3
      %p52 = por %p50, %p51
      %p54 = scmp.ne.s32.totalorder %s37, %s53
      %p55 = scmp.eq.s32.totalorder %s15, 0
      %p56 = por %p54, %p55
      %s58 = sadd.s32 %s57, 1
      %p61 = scmp.eq.s32.totalorder %s9, 3
      %p62 = scmp.ne.s32.totalorder %s57, %s59
      %p63 = scmp.eq.s32.totalorder %s9, 0
      %p64 = por %p62, %p63
      %p65 = scmp.ne.s32.totalorder %s57, %s59
      %p66 = scmp.eq.s32.totalorder %s14, 3
      %p67 = por %p65, %p66
      %p68 = scmp.ne.s32.totalorder %s59, %s60
      %p69 = scmp.eq.s32.totalorder %s14, 0
      %p70 = por %p68, %p69
      %p71 = scmp.ne.s32.totalorder %s59, %s60
      %p72 = scmp.eq.s32.totalorder %s15, 3
      %p73 = por %p71, %p72
      %p75 = scmp.ne.s32.totalorder %s60, %s74
      %p76 = scmp.eq.s32.totalorder %s15, 0
      %p77 = por %p75, %p76
      %s79 = sadd.s32 %s78, 1
      %p82 = scmp.eq.s32.totalorder %s9, 3
      %p83 = scmp.ne.s32.totalorder %s78, %s80
      %p84 = scmp.eq.s32.totalorder %s9, 0
      %p85 = por %p83, %p84
      %p86 = scmp.ne.s32.totalorder %s78, %s80
      %p87 = scmp.eq.s32.totalorder %s14, 3
      %p88 = por %p86, %p87
      %p89 = scmp.ne.s32.totalorder %s80, %s81
      %p90 = scmp.eq.s32.totalorder %s14, 0
      %p91 = por %p89, %p90
      %p92 = scmp.ne.s32.totalorder %s80, %s81
      %p93 = scmp.eq.s32.totalorder %s15, 3
      %p94 = por %p92, %p93
      %p96 = scmp.ne.s32.totalorder %s81, %s95
      %p97 = scmp.eq.s32.totalorder %s15, 0
      %p98 = por %p96, %p97
      %s99 = ssub.s32 %s16, %s28
      %p100 = scmp.eq.s32.totalorder %s99, 0
      %s102 = sadd.s32 %s101, 1
      %s103 = scalar_select %p100, %s101, %s102
      %p106 = pneg %p100
      %p107 = scmp.eq.s32.totalorder %s9, 3
      %p108 = por %p106, %p107
      %p109 = scmp.ne.s32.totalorder %s101, %s104
      %p110 = scmp.eq.s32.totalorder %s9, 0
      %p111 = por %p109, %p110
      %p112 = scmp.ne.s32.totalorder %s101, %s104
      %p113 = scmp.eq.s32.totalorder %s14, 3
      %p114 = por %p112, %p113
      %p115 = scmp.ne.s32.totalorder %s104, %s105
      %p116 = scmp.eq.s32.totalorder %s14, 0
      %p117 = por %p115, %p116
      %p118 = scmp.ne.s32.totalorder %s104, %s105
      %p119 = scmp.eq.s32.totalorder %s15, 3
      %p120 = por %p118, %p119
      %p122 = scmp.ne.s32.totalorder %s105, %s121
      %p123 = scmp.eq.s32.totalorder %s15, 0
      %p124 = por %p122, %p123
      %p125 = scmp.le.s32.totalorder 1, %s9
      %p126 = scmp.lt.s32.totalorder %s9, 5
      %p127 = pnand %p125, %p126
      %p128 = pneg %p127
      // Predicated region
      $region9: #{gcn_forward.3} parent=5 // pred_check
        _
      $region10: #{gcn_forward.3} parent=5 // pred_check_branch
        %130 = sbr.rel (%p127) target = $region12
      $region11: #{gcn_forward.3} parent=5 // pred_region
        %s131 = ssub.s32 %s9, 1
        // Predicated region
        $region13: #{gcn_forward.3} parent=11 // pred_check
          %p132 = pneg %p70
        $region14: #{gcn_forward.3} parent=11 // pred_check_branch
          %134 = sbr.rel (%p132) target = $region16
        $region15: #{gcn_forward.3} parent=11 // pred_region
          _
        $region16: #{gcn_forward.3} parent=11 // pred_fallthru
          _
        // Predicated region
        $region17: #{gcn_forward.3} parent=11 // pred_check
          %p135 = pneg %p91
        $region18: #{gcn_forward.3} parent=11 // pred_check_branch
          %137 = sbr.rel (%p135) target = $region20
        $region19: #{gcn_forward.3} parent=11 // pred_region
          _
        $region20: #{gcn_forward.3} parent=11 // pred_fallthru
          _
      $region12: #{gcn_forward.3} parent=5 // pred_fallthru
        _
      %p138 = scmp.lt.s32.totalorder %s9, 4
      // Predicated region
      $region21: #{gcn_forward.3} parent=5 // pred_check
        %p139 = pneg %p138
      $region22: #{gcn_forward.3} parent=5 // pred_check_branch
        %141 = sbr.rel (%p139) target = $region24
      $region23: #{gcn_forward.3} parent=5 // pred_region
        // Predicated region
        $region25: #{gcn_forward.3} parent=23 // pred_check
          %p142 = pneg %p43
        $region26: #{gcn_forward.3} parent=23 // pred_check_branch
          %144 = sbr.rel (%p142) target = $region28
        $region27: #{gcn_forward.3} parent=23 // pred_region
          %s145 = sand.u32 %s33, 1
          %s146 = sand.u32 %s33, 1
          %s147 = smul.addr %s146, 64
          %s148 = scalar_lea.vmem [#allocation3], %s147
          %s149 = smul.u32 16, %s16
          %s150 = smul.addr %s149, 2
          %s151 = sadd.s32 %s17, %s150
          %s152 = smul.addr %s151, 4
          %s153 = scalar_lea.vmem %s0, %s152
          // Predicated region
          $region29: #{gcn_forward.3} parent=27 // pred_check
            _
          $region30: #{gcn_forward.3} parent=27 // pred_check_branch
            %155 = sbr.rel (0) target = $region32
          $region31: #{gcn_forward.3} parent=27 // pred_region
            // Predicated region
            $region33: #{gcn_forward.3} parent=31 // pred_check
              _
            $region34: #{gcn_forward.3} parent=31 // pred_check_branch
              %157 = sbr.rel target = $region36
            $region35: #{gcn_forward.3} parent=31 // pred_region
              // Predicated region
              $region48: #{gcn_forward.3} parent=35 // pred_check
                _
              $region49: #{gcn_forward.3} parent=35 // pred_check_branch
                %203 = sbr.rel (0) target = $region51
              $region50: #{gcn_forward.3} parent=35 // pred_region
                loop: start=0, step=1, limit=1
                $region52: #{gcn_forward.3} parent=50 // loop_pre_header
                  _
                $region53: #{gcn_forward.3} parent=50 // loop_header
                  %s205 = sphi 0, %s209
                  %p206 = scmp.ge.s32.totalorder %s205, 1
                  %s210 = sphi %s153, %s153
                  %s211 = sphi %s148, %s148
                $region54: #{gcn_forward.3} parent=50 // loop_header_branch
                  %208 = sbr.rel (%p206) target = $region58
                $region55: #{gcn_forward.3} parent=50 // loop_body
                  _
                $region56: #{gcn_forward.3} parent=50 // loop_footer
                  %s209 = sadd.s32 1, %s205
                $region57: #{gcn_forward.3} parent=50 // loop_footer_branch
                  %204 = sbr.rel target = $region53
                $region58: #{gcn_forward.3} parent=50 // loop_exit
                  _
                %s213 = ssub.s32 16, 1
                loop: start=0, step=1, limit=1
                $region59: #{gcn_forward.3} parent=50 // loop_pre_header
                  _
                $region60: #{gcn_forward.3} parent=50 // loop_header
                  %s215 = sphi 0, %s219
                  %p216 = scmp.ge.s32.totalorder %s215, 1
                  %s220 = sphi %s153, %s153
                  %s221 = sphi %s148, %s148
                $region61: #{gcn_forward.3} parent=50 // loop_header_branch
                  %218 = sbr.rel (%p216) target = $region65
                $region62: #{gcn_forward.3} parent=50 // loop_body
                  %v222 = vld [vmem:[%s220] sm:%s213]
                  %223 = vst [vmem:[%s221] sm:%s213] %v222
                  %v224 = vld [vmem:[%s220 + $0x8] sm:%s213]
                  %225 = vst [vmem:[%s221 + $0x4] sm:%s213] %v224
                  %v226 = vld [vmem:[%s220 + $0x10] sm:%s213]
                  %227 = vst [vmem:[%s221 + $0x8] sm:%s213] %v226
                  %v228 = vld [vmem:[%s220 + $0x18] sm:%s213]
                  %229 = vst [vmem:[%s221 + $0xc] sm:%s213] %v228
                  %v230 = vld [vmem:[%s220 + $0x20] sm:%s213]
                  %231 = vst [vmem:[%s221 + $0x10] sm:%s213] %v230
                  %v232 = vld [vmem:[%s220 + $0x28] sm:%s213]
                  %233 = vst [vmem:[%s221 + $0x14] sm:%s213] %v232
                  %v234 = vld [vmem:[%s220 + $0x30] sm:%s213]
                  %235 = vst [vmem:[%s221 + $0x18] sm:%s213] %v234
                  %v236 = vld [vmem:[%s220 + $0x38] sm:%s213]
                  %237 = vst [vmem:[%s221 + $0x1c] sm:%s213] %v236
                  %v238 = vld [vmem:[%s220 + $0x40] sm:%s213]
                  %239 = vst [vmem:[%s221 + $0x20] sm:%s213] %v238
                  %v240 = vld [vmem:[%s220 + $0x48] sm:%s213]
                  %241 = vst [vmem:[%s221 + $0x24] sm:%s213] %v240
                  %v242 = vld [vmem:[%s220 + $0x50] sm:%s213]
                  %243 = vst [vmem:[%s221 + $0x28] sm:%s213] %v242
                  %v244 = vld [vmem:[%s220 + $0x58] sm:%s213]
                  %245 = vst [vmem:[%s221 + $0x2c] sm:%s213] %v244
                  %v246 = vld [vmem:[%s220 + $0x60] sm:%s213]
                  %247 = vst [vmem:[%s221 + $0x30] sm:%s213] %v246
                  %v248 = vld [vmem:[%s220 + $0x68] sm:%s213]
                  %249 = vst [vmem:[%s221 + $0x34] sm:%s213] %v248
                  %v250 = vld [vmem:[%s220 + $0x70] sm:%s213]
                  %251 = vst [vmem:[%s221 + $0x38] sm:%s213] %v250
                  %v252 = vld [vmem:[%s220 + $0x78] sm:%s213]
                  %253 = vst [vmem:[%s221 + $0x3c] sm:%s213] %v252
                $region63: #{gcn_forward.3} parent=50 // loop_footer
                  %s219 = sadd.s32 1, %s215
                $region64: #{gcn_forward.3} parent=50 // loop_footer_branch
                  %214 = sbr.rel target = $region60
                $region65: #{gcn_forward.3} parent=50 // loop_exit
                  _
              $region51: #{gcn_forward.3} parent=35 // pred_fallthru
                _
            $region36: #{gcn_forward.3} parent=31 // pred_fallthru
              _
            // Predicated region
            $region37: #{gcn_forward.3} parent=31 // pred_check
              _
            $region38: #{gcn_forward.3} parent=31 // pred_check_branch
              %159 = sbr.rel (0) target = $region40
            $region39: #{gcn_forward.3} parent=31 // pred_region
              %s161 = ssub.s32 16, 1
              loop: start=0, step=1, limit=1
              $region41: #{gcn_forward.3} parent=39 // loop_pre_header
                _
              $region42: #{gcn_forward.3} parent=39 // loop_header
                %s163 = sphi 0, %s167
                %p164 = scmp.ge.s32.totalorder %s163, 1
                %s168 = sphi %s153, %s153
                %s169 = sphi %s148, %s148
              $region43: #{gcn_forward.3} parent=39 // loop_header_branch
                %166 = sbr.rel (%p164) target = $region47
              $region44: #{gcn_forward.3} parent=39 // loop_body
                %v170 = vld [vmem:[%s168] sm:%s161]
                %171 = vst [vmem:[%s169] sm:%s161] %v170
                %v172 = vld [vmem:[%s168 + $0x8] sm:%s161]
                %173 = vst [vmem:[%s169 + $0x4] sm:%s161] %v172
                %v174 = vld [vmem:[%s168 + $0x10] sm:%s161]
                %175 = vst [vmem:[%s169 + $0x8] sm:%s161] %v174
                %v176 = vld [vmem:[%s168 + $0x18] sm:%s161]
                %177 = vst [vmem:[%s169 + $0xc] sm:%s161] %v176
                %v178 = vld [vmem:[%s168 + $0x20] sm:%s161]
                %179 = vst [vmem:[%s169 + $0x10] sm:%s161] %v178
                %v180 = vld [vmem:[%s168 + $0x28] sm:%s161]
                %181 = vst [vmem:[%s169 + $0x14] sm:%s161] %v180
                %v182 = vld [vmem:[%s168 + $0x30] sm:%s161]
                %183 = vst [vmem:[%s169 + $0x18] sm:%s161] %v182
                %v184 = vld [vmem:[%s168 + $0x38] sm:%s161]
                %185 = vst [vmem:[%s169 + $0x1c] sm:%s161] %v184
                %v186 = vld [vmem:[%s168 + $0x40] sm:%s161]
                %187 = vst [vmem:[%s169 + $0x20] sm:%s161] %v186
                %v188 = vld [vmem:[%s168 + $0x48] sm:%s161]
                %189 = vst [vmem:[%s169 + $0x24] sm:%s161] %v188
                %v190 = vld [vmem:[%s168 + $0x50] sm:%s161]
                %191 = vst [vmem:[%s169 + $0x28] sm:%s161] %v190
                %v192 = vld [vmem:[%s168 + $0x58] sm:%s161]
                %193 = vst [vmem:[%s169 + $0x2c] sm:%s161] %v192
                %v194 = vld [vmem:[%s168 + $0x60] sm:%s161]
                %195 = vst [vmem:[%s169 + $0x30] sm:%s161] %v194
                %v196 = vld [vmem:[%s168 + $0x68] sm:%s161]
                %197 = vst [vmem:[%s169 + $0x34] sm:%s161] %v196
                %v198 = vld [vmem:[%s168 + $0x70] sm:%s161]
                %199 = vst [vmem:[%s169 + $0x38] sm:%s161] %v198
                %v200 = vld [vmem:[%s168 + $0x78] sm:%s161]
                %201 = vst [vmem:[%s169 + $0x3c] sm:%s161] %v200
              $region45: #{gcn_forward.3} parent=39 // loop_footer
                %s167 = sadd.s32 1, %s163
              $region46: #{gcn_forward.3} parent=39 // loop_footer_branch
                %162 = sbr.rel target = $region42
              $region47: #{gcn_forward.3} parent=39 // loop_exit
                _
            $region40: #{gcn_forward.3} parent=31 // pred_fallthru
              _
          $region32: #{gcn_forward.3} parent=27 // pred_fallthru
            _
          %254 = vnop
        $region28: #{gcn_forward.3} parent=23 // pred_fallthru
          _
      $region24: #{gcn_forward.3} parent=5 // pred_fallthru
        _
      %p255 = scmp.le.s32.totalorder 1, %s9
      %p256 = scmp.lt.s32.totalorder %s9, 5
      %p257 = pnand %p255, %p256
      %p258 = pneg %p257
      // Predicated region
      $region66: #{gcn_forward.3} parent=5 // pred_check
        _
      $region67: #{gcn_forward.3} parent=5 // pred_check_branch
        %260 = sbr.rel (%p257) target = $region69
      $region68: #{gcn_forward.3} parent=5 // pred_region
        %s261 = ssub.s32 %s9, 1
        %s262 = sand.u32 %s36, 1
        %s263 = sand.u32 %s36, 1
        %s264 = smul.addr %s263, 64
        %s265 = scalar_lea.vmem [#allocation3], %s264
        // Predicated region
        $region70: #{gcn_forward.3} parent=68 // pred_check
          %p266 = pneg %p49
        $region71: #{gcn_forward.3} parent=68 // pred_check_branch
          %268 = sbr.rel (%p266) target = $region73
        $region72: #{gcn_forward.3} parent=68 // pred_region
          _
        $region73: #{gcn_forward.3} parent=68 // pred_fallthru
          _
        %s269 = sand.u32 %s36, 1
        %s270 = sand.u32 %s36, 1
        %s271 = smul.addr %s270, 64
        %s272 = scalar_lea.vmem [#allocation3], %s271
        %p273 = pneg %p49
        %p274 = pneg %p46
        %p275 = pneg %p70
        %p276 = pneg %p67
        %p277 = pneg %p91
        %p278 = pneg %p88
        %p279 = pneg %p117
        %p280 = pneg %p114
        %s281 = smul.u32 16, %s18
        %p282 = scmp.lt.s32.totalorder %s281, 31
        %s283 = scalar_select %p282, %s281, 31
        %s284 = smul.addr %s283, 8
        %s285 = scalar_lea.vmem %s3, %s284
        %s286 = smul.u32 16, %s18
        %s287 = smul.u32 16, %s18
        %p288 = scmp.lt.s32.totalorder %s287, 31
        %s289 = scalar_select %p288, %s287, 31
        %s290 = smul.addr %s289, 8
        %s291 = scalar_lea.vmem %s3, %s290
        %s292 = smul.u32 16, %s18
        %p294 = scmp.eq.s32.totalorder %s19, 0
        // Predicated region
        $region74: #{gcn_forward.3} parent=68 // pred_check
          %p295 = pneg %p294
        $region75: #{gcn_forward.3} parent=68 // pred_check_branch
          %297 = sbr.rel (%p295) target = $region77
        $region76: #{gcn_forward.3} parent=68 // pred_region
          %298 = vst [vmem:[#allocation2] sm:$0xff] 0.0
          %299 = vst [vmem:[#allocation2 + $0x8] sm:$0xff] 0.0
          %300 = vst [vmem:[#allocation2 + $0x10] sm:$0xff] 0.0
          %301 = vst [vmem:[#allocation2 + $0x18] sm:$0xff] 0.0
          %302 = vst [vmem:[#allocation2 + $0x20] sm:$0xff] 0.0
          %303 = vst [vmem:[#allocation2 + $0x28] sm:$0xff] 0.0
          %304 = vst [vmem:[#allocation2 + $0x30] sm:$0xff] 0.0
          %305 = vst [vmem:[#allocation2 + $0x38] sm:$0xff] 0.0
          %306 = vst [vmem:[#allocation2 + $0x40] sm:$0xff] 0.0
          %307 = vst [vmem:[#allocation2 + $0x48] sm:$0xff] 0.0
          %308 = vst [vmem:[#allocation2 + $0x50] sm:$0xff] 0.0
          %309 = vst [vmem:[#allocation2 + $0x58] sm:$0xff] 0.0
          %310 = vst [vmem:[#allocation2 + $0x60] sm:$0xff] 0.0
          %311 = vst [vmem:[#allocation2 + $0x68] sm:$0xff] 0.0
          %312 = vst [vmem:[#allocation2 + $0x70] sm:$0xff] 0.0
          %313 = vst [vmem:[#allocation2 + $0x78] sm:$0xff] 0.0
        $region77: #{gcn_forward.3} parent=68 // pred_fallthru
          _
        %s314 = smul.u32 %s19, 128
        %s315 = sshra.s32 %s314, 3
        %s316 = sand.u32 %s314, 7
        %s317 = smul.addr %s315, 4
        %s318 = scalar_lea.vmem %s1, %s317
        %v319 = vld [vmem:[%s318] sm:$0xf]
        %v320 = vld [vmem:[%s318 + $0x4] sm:$0xf]
        %v321 = vld [vmem:[%s318 + $0x8] sm:$0xf]
        %v322 = vld [vmem:[%s318 + $0xc] sm:$0xf]
        %v323 = vld [vmem:[%s318 + $0x10] sm:$0xf]
        %v324 = vld [vmem:[%s318 + $0x14] sm:$0xf]
        %v325 = vld [vmem:[%s318 + $0x18] sm:$0xf]
        %v326 = vld [vmem:[%s318 + $0x1c] sm:$0xf]
        %v327 = vld [vmem:[%s318 + $0x20] sm:$0xf]
        %v328 = vld [vmem:[%s318 + $0x24] sm:$0xf]
        %v329 = vld [vmem:[%s318 + $0x28] sm:$0xf]
        %v330 = vld [vmem:[%s318 + $0x2c] sm:$0xf]
        %v331 = vld [vmem:[%s318 + $0x30] sm:$0xf]
        %v332 = vld [vmem:[%s318 + $0x34] sm:$0xf]
        %v333 = vld [vmem:[%s318 + $0x38] sm:$0xf]
        %v334 = vld [vmem:[%s318 + $0x3c] sm:$0xf]
        %v335 = vld [vmem:[#allocation2] sm:$0xff]
        %v336 = vld [vmem:[#allocation2 + $0x8] sm:$0xff]
        %v337 = vld [vmem:[#allocation2 + $0x10] sm:$0xff]
        %v338 = vld [vmem:[#allocation2 + $0x18] sm:$0xff]
        %v339 = vld [vmem:[#allocation2 + $0x20] sm:$0xff]
        %v340 = vld [vmem:[#allocation2 + $0x28] sm:$0xff]
        %v341 = vld [vmem:[#allocation2 + $0x30] sm:$0xff]
        %v342 = vld [vmem:[#allocation2 + $0x38] sm:$0xff]
        %v343 = vld [vmem:[#allocation2 + $0x40] sm:$0xff]
        %v344 = vld [vmem:[#allocation2 + $0x48] sm:$0xff]
        %v345 = vld [vmem:[#allocation2 + $0x50] sm:$0xff]
        %v346 = vld [vmem:[#allocation2 + $0x58] sm:$0xff]
        %v347 = vld [vmem:[#allocation2 + $0x60] sm:$0xff]
        %v348 = vld [vmem:[#allocation2 + $0x68] sm:$0xff]
        %v349 = vld [vmem:[#allocation2 + $0x70] sm:$0xff]
        %v350 = vld [vmem:[#allocation2 + $0x78] sm:$0xff]
        %v351 = vld [vmem:[%s265] sm:$0xf]
        %v352 = vld [vmem:[%s265 + $0x4] sm:$0xf]
        %v353 = vld [vmem:[%s265 + $0x8] sm:$0xf]
        %v354 = vld [vmem:[%s265 + $0xc] sm:$0xf]
        %v355 = vld [vmem:[%s265 + $0x10] sm:$0xf]
        %v356 = vld [vmem:[%s265 + $0x14] sm:$0xf]
        %v357 = vld [vmem:[%s265 + $0x18] sm:$0xf]
        %v358 = vld [vmem:[%s265 + $0x1c] sm:$0xf]
        %v359 = vld [vmem:[%s265 + $0x20] sm:$0xf]
        %v360 = vld [vmem:[%s265 + $0x24] sm:$0xf]
        %v361 = vld [vmem:[%s265 + $0x28] sm:$0xf]
        %v362 = vld [vmem:[%s265 + $0x2c] sm:$0xf]
        %v363 = vld [vmem:[%s265 + $0x30] sm:$0xf]
        %v364 = vld [vmem:[%s265 + $0x34] sm:$0xf]
        %v365 = vld [vmem:[%s265 + $0x38] sm:$0xf]
        %v366 = vld [vmem:[%s265 + $0x3c] sm:$0xf]
        %v383 = vunpack.c.l.b16 %v351
        %v384 = vunpack.c.l.b16 %v352
        %v385 = vunpack.c.l.b16 %v353
        %v386 = vunpack.c.l.b16 %v354
        %v387 = vunpack.c.l.b16 %v355
        %v388 = vunpack.c.l.b16 %v356
        %v389 = vunpack.c.l.b16 %v357
        %v390 = vunpack.c.l.b16 %v358
        %v391 = vunpack.c.l.b16 %v359
        %v392 = vunpack.c.l.b16 %v360
        %v393 = vunpack.c.l.b16 %v361
        %v394 = vunpack.c.l.b16 %v362
        %v395 = vunpack.c.l.b16 %v363
        %v396 = vunpack.c.l.b16 %v364
        %v397 = vunpack.c.l.b16 %v365
        %v398 = vunpack.c.l.b16 %v366
        %v399 = vpack.c.b16 %v384, %v383
        %v400 = vpack.c.b16 %v386, %v385
        %v401 = vpack.c.b16 %v388, %v387
        %v402 = vpack.c.b16 %v390, %v389
        %v403 = vpack.c.b16 %v392, %v391
        %v404 = vpack.c.b16 %v394, %v393
        %v405 = vpack.c.b16 %v396, %v395
        %v406 = vpack.c.b16 %v398, %v397
        %v431 = vunpack.c.l.b16 %v319
        %v432 = vunpack.c.l.b16 %v320
        %v433 = vunpack.c.l.b16 %v321
        %v434 = vunpack.c.l.b16 %v322
        %v435 = vunpack.c.l.b16 %v323
        %v436 = vunpack.c.l.b16 %v324
        %v437 = vunpack.c.l.b16 %v325
        %v438 = vunpack.c.l.b16 %v326
        %v439 = vunpack.c.l.b16 %v327
        %v440 = vunpack.c.l.b16 %v328
        %v441 = vunpack.c.l.b16 %v329
        %v442 = vunpack.c.l.b16 %v330
        %v443 = vunpack.c.l.b16 %v331
        %v444 = vunpack.c.l.b16 %v332
        %v445 = vunpack.c.l.b16 %v333
        %v446 = vunpack.c.l.b16 %v334
        %v447 = vpack.c.b16 %v432, %v431
        %v448 = vpack.c.b16 %v434, %v433
        %v449 = vpack.c.b16 %v436, %v435
        %v450 = vpack.c.b16 %v438, %v437
        %v451 = vpack.c.b16 %v440, %v439
        %v452 = vpack.c.b16 %v442, %v441
        %v453 = vpack.c.b16 %v444, %v443
        %v454 = vpack.c.b16 %v446, %v445
        %463 = vmatprep.subr.bf16.mxu0 0
        %464 = vmatpush1.bf16.msra.mxu0 %v454
        %465 = vmatprep.subr.bf16.mxu0 0
        %466 = vmatpush1.bf16.msra.mxu0 %v453
        %467 = vmatprep.subr.bf16.mxu0 0
        %468 = vmatpush1.bf16.msra.mxu0 %v452
        %469 = vmatprep.subr.bf16.mxu0 0
        %470 = vmatpush1.bf16.msra.mxu0 %v451
        %471 = vmatprep.subr.bf16.mxu0 0
        %472 = vmatpush1.bf16.msra.mxu0 %v450
        %473 = vmatprep.subr.bf16.mxu0 0
        %474 = vmatpush1.bf16.msra.mxu0 %v449
        %475 = vmatprep.subr.bf16.mxu0 0
        %476 = vmatpush1.bf16.msra.mxu0 %v448
        %477 = vmatprep.subr.bf16.mxu0 0
        %478 = vmatpush1.bf16.msra.mxu0 %v447
        %479 = vmatprep.subr.bf16.mxu0 0
        %480 = vmatpush2.bf16.msra.mxu0 0
        %481 = vmatprep.subr.bf16.mxu0 0
        %482 = vmatpush2.bf16.msra.mxu0 0
        %483 = vmatprep.subr.bf16.mxu0 0
        %484 = vmatpush2.bf16.msra.mxu0 0
        %485 = vmatprep.subr.bf16.mxu0 0
        %486 = vmatpush2.bf16.msra.mxu0 0
        %487 = vmatprep.subr.bf16.mxu0 0
        %488 = vmatpush2.bf16.msra.mxu0 0
        %489 = vmatprep.subr.bf16.mxu0 0
        %490 = vmatpush2.bf16.msra.mxu0 0
        %491 = vmatprep.subr.bf16.mxu0 0
        %492 = vmatpush2.bf16.msra.mxu0 0
        %493 = vmatprep.subr.bf16.mxu0 0
        %494 = vmatpush2.bf16.msra.mxu0 0
        %495 = vmatprep.mubr.bf16.mxu0 0
        %496 = vmatmul.mubr.bf16.gmra.mxu0 %v399
        %v497 = vpop.f32.mrf.mxu0
        %v498 = vadd.f32 0.0, %v497
        %v499 = vpop.f32.mrf.mxu0
        %v500 = vpop.f32.mrf.mxu0
        %v501 = vadd.f32 0.0, %v500
        %v502 = vpop.f32.mrf.mxu0
        %503 = vmatprep.mubr.bf16.mxu0 0
        %504 = vmatmul.mubr.bf16.gmra.mxu0 %v400
        %v505 = vpop.f32.mrf.mxu0
        %v506 = vadd.f32 0.0, %v505
        %v507 = vpop.f32.mrf.mxu0
        %v508 = vpop.f32.mrf.mxu0
        %v509 = vadd.f32 0.0, %v508
        %v510 = vpop.f32.mrf.mxu0
        %511 = vmatprep.mubr.bf16.mxu0 0
        %512 = vmatmul.mubr.bf16.gmra.mxu0 %v401
        %v513 = vpop.f32.mrf.mxu0
        %v514 = vadd.f32 0.0, %v513
        %v515 = vpop.f32.mrf.mxu0
        %v516 = vpop.f32.mrf.mxu0
        %v517 = vadd.f32 0.0, %v516
        %v518 = vpop.f32.mrf.mxu0
        %519 = vmatprep.mubr.bf16.mxu0 0
        %520 = vmatmul.mubr.bf16.gmra.mxu0 %v402
        %v521 = vpop.f32.mrf.mxu0
        %v522 = vadd.f32 0.0, %v521
        %v523 = vpop.f32.mrf.mxu0
        %v524 = vpop.f32.mrf.mxu0
        %v525 = vadd.f32 0.0, %v524
        %v526 = vpop.f32.mrf.mxu0
        %527 = vmatprep.mubr.bf16.mxu0 0
        %528 = vmatmul.mubr.bf16.gmra.mxu0 %v403
        %v529 = vpop.f32.mrf.mxu0
        %v530 = vadd.f32 0.0, %v529
        %v531 = vpop.f32.mrf.mxu0
        %v532 = vpop.f32.mrf.mxu0
        %v533 = vadd.f32 0.0, %v532
        %v534 = vpop.f32.mrf.mxu0
        %535 = vmatprep.mubr.bf16.mxu0 0
        %536 = vmatmul.mubr.bf16.gmra.mxu0 %v404
        %v537 = vpop.f32.mrf.mxu0
        %v538 = vadd.f32 0.0, %v537
        %v539 = vpop.f32.mrf.mxu0
        %v540 = vpop.f32.mrf.mxu0
        %v541 = vadd.f32 0.0, %v540
        %v542 = vpop.f32.mrf.mxu0
        %543 = vmatprep.mubr.bf16.mxu0 0
        %544 = vmatmul.mubr.bf16.gmra.mxu0 %v405
        %v545 = vpop.f32.mrf.mxu0
        %v546 = vadd.f32 0.0, %v545
        %v547 = vpop.f32.mrf.mxu0
        %v548 = vpop.f32.mrf.mxu0
        %v549 = vadd.f32 0.0, %v548
        %v550 = vpop.f32.mrf.mxu0
        %551 = vmatprep.mubr.bf16.mxu0 0
        %552 = vmatmul.mubr.bf16.gmra.mxu0 %v406
        %v553 = vpop.f32.mrf.mxu0
        %v554 = vadd.f32 0.0, %v553
        %v555 = vpop.f32.mrf.mxu0
        %v556 = vpop.f32.mrf.mxu0
        %v557 = vadd.f32 0.0, %v556
        %v558 = vpop.f32.mrf.mxu0
        %559 = vdwg.mxu0
        %v560 = vadd.f32 %v335, %v498
        %v561 = vadd.f32 %v336, %v501
        %v562 = vadd.f32 %v337, %v506
        %v563 = vadd.f32 %v338, %v509
        %v564 = vadd.f32 %v339, %v514
        %v565 = vadd.f32 %v340, %v517
        %v566 = vadd.f32 %v341, %v522
        %v567 = vadd.f32 %v342, %v525
        %v568 = vadd.f32 %v343, %v530
        %v569 = vadd.f32 %v344, %v533
        %v570 = vadd.f32 %v345, %v538
        %v571 = vadd.f32 %v346, %v541
        %v572 = vadd.f32 %v347, %v546
        %v573 = vadd.f32 %v348, %v549
        %v574 = vadd.f32 %v349, %v554
        %v575 = vadd.f32 %v350, %v557
        %576 = vst [vmem:[#allocation2] sm:$0xff] %v560
        %577 = vst [vmem:[#allocation2 + $0x8] sm:$0xff] %v561
        %578 = vst [vmem:[#allocation2 + $0x10] sm:$0xff] %v562
        %579 = vst [vmem:[#allocation2 + $0x18] sm:$0xff] %v563
        %580 = vst [vmem:[#allocation2 + $0x20] sm:$0xff] %v564
        %581 = vst [vmem:[#allocation2 + $0x28] sm:$0xff] %v565
        %582 = vst [vmem:[#allocation2 + $0x30] sm:$0xff] %v566
        %583 = vst [vmem:[#allocation2 + $0x38] sm:$0xff] %v567
        %584 = vst [vmem:[#allocation2 + $0x40] sm:$0xff] %v568
        %585 = vst [vmem:[#allocation2 + $0x48] sm:$0xff] %v569
        %586 = vst [vmem:[#allocation2 + $0x50] sm:$0xff] %v570
        %587 = vst [vmem:[#allocation2 + $0x58] sm:$0xff] %v571
        %588 = vst [vmem:[#allocation2 + $0x60] sm:$0xff] %v572
        %589 = vst [vmem:[#allocation2 + $0x68] sm:$0xff] %v573
        %590 = vst [vmem:[#allocation2 + $0x70] sm:$0xff] %v574
        %591 = vst [vmem:[#allocation2 + $0x78] sm:$0xff] %v575
        %p592 = scmp.eq.s32.totalorder %s19, 1
        // Predicated region
        $region78: #{gcn_forward.3} parent=68 // pred_check
          %p593 = pneg %p592
        $region79: #{gcn_forward.3} parent=68 // pred_check_branch
          %595 = sbr.rel (%p593) target = $region81
        $region80: #{gcn_forward.3} parent=68 // pred_region
          %v596 = vld [vmem:[#allocation2] sm:$0xff]
          %v597 = vld [vmem:[#allocation2 + $0x8] sm:$0xff]
          %v598 = vld [vmem:[#allocation2 + $0x10] sm:$0xff]
          %v599 = vld [vmem:[#allocation2 + $0x18] sm:$0xff]
          %v600 = vld [vmem:[#allocation2 + $0x20] sm:$0xff]
          %v601 = vld [vmem:[#allocation2 + $0x28] sm:$0xff]
          %v602 = vld [vmem:[#allocation2 + $0x30] sm:$0xff]
          %v603 = vld [vmem:[#allocation2 + $0x38] sm:$0xff]
          %v604 = vld [vmem:[#allocation2 + $0x40] sm:$0xff]
          %v605 = vld [vmem:[#allocation2 + $0x48] sm:$0xff]
          %v606 = vld [vmem:[#allocation2 + $0x50] sm:$0xff]
          %v607 = vld [vmem:[#allocation2 + $0x58] sm:$0xff]
          %v608 = vld [vmem:[#allocation2 + $0x60] sm:$0xff]
          %v609 = vld [vmem:[#allocation2 + $0x68] sm:$0xff]
          %v610 = vld [vmem:[#allocation2 + $0x70] sm:$0xff]
          %v611 = vld [vmem:[#allocation2 + $0x78] sm:$0xff]
          %v612 = vld [vmem:[%s2] sm:$0x1]
          %v614 = vlaneseq
          %v615 = vshrl.u32 %v614, 7
          %v616 = vsub.s32 0, %v615
          %v617 = vrot.slane %v612, %v616
          %v619 = vadd.f32 %v596, %v617
          %v620 = vadd.f32 %v597, %v617
          %v621 = vadd.f32 %v598, %v617
          %v622 = vadd.f32 %v599, %v617
          %v623 = vadd.f32 %v600, %v617
          %v624 = vadd.f32 %v601, %v617
          %v625 = vadd.f32 %v602, %v617
          %v626 = vadd.f32 %v603, %v617
          %v627 = vadd.f32 %v604, %v617
          %v628 = vadd.f32 %v605, %v617
          %v629 = vadd.f32 %v606, %v617
          %v630 = vadd.f32 %v607, %v617
          %v631 = vadd.f32 %v608, %v617
          %v632 = vadd.f32 %v609, %v617
          %v633 = vadd.f32 %v610, %v617
          %v634 = vadd.f32 %v611, %v617
          %635 = vst [vmem:[%s291] sm:$0xff] %v619
          %636 = vst [vmem:[%s291 + $0x8] sm:$0xff] %v620
          %637 = vst [vmem:[%s291 + $0x10] sm:$0xff] %v621
          %638 = vst [vmem:[%s291 + $0x18] sm:$0xff] %v622
          %639 = vst [vmem:[%s291 + $0x20] sm:$0xff] %v623
          %640 = vst [vmem:[%s291 + $0x28] sm:$0xff] %v624
          %641 = vst [vmem:[%s291 + $0x30] sm:$0xff] %v625
          %642 = vst [vmem:[%s291 + $0x38] sm:$0xff] %v626
          %643 = vst [vmem:[%s291 + $0x40] sm:$0xff] %v627
          %644 = vst [vmem:[%s291 + $0x48] sm:$0xff] %v628
          %645 = vst [vmem:[%s291 + $0x50] sm:$0xff] %v629
          %646 = vst [vmem:[%s291 + $0x58] sm:$0xff] %v630
          %647 = vst [vmem:[%s291 + $0x60] sm:$0xff] %v631
          %648 = vst [vmem:[%s291 + $0x68] sm:$0xff] %v632
          %649 = vst [vmem:[%s291 + $0x70] sm:$0xff] %v633
          %650 = vst [vmem:[%s291 + $0x78] sm:$0xff] %v634
        $region81: #{gcn_forward.3} parent=68 // pred_fallthru
          _
        %s651 = smul.u32 16, %s18
        %p652 = scmp.lt.s32.totalorder %s651, 31
        %s653 = scalar_select %p652, %s651, 31
        %s654 = smul.addr %s653, 8
        %s655 = scalar_lea.vmem %s3, %s654
        // Predicated region
        $region82: #{gcn_forward.3} parent=68 // pred_check
          %p656 = pneg %p114
        $region83: #{gcn_forward.3} parent=68 // pred_check_branch
          %658 = sbr.rel (%p656) target = $region85
        $region84: #{gcn_forward.3} parent=68 // pred_region
          %s659 = smul.u32 16, %s18
        $region85: #{gcn_forward.3} parent=68 // pred_fallthru
          _
      $region69: #{gcn_forward.3} parent=5 // pred_fallthru
        _
      %p660 = scmp.le.s32.totalorder 2, %s9
      // Predicated region
      $region86: #{gcn_forward.3} parent=5 // pred_check
        %p661 = pneg %p660
      $region87: #{gcn_forward.3} parent=5 // pred_check_branch
        %663 = sbr.rel (%p661) target = $region89
      $region88: #{gcn_forward.3} parent=5 // pred_region
        %s664 = ssub.s32 %s9, 2
        // Predicated region
        $region90: #{gcn_forward.3} parent=88 // pred_check
          %p665 = pneg %p120
        $region91: #{gcn_forward.3} parent=88 // pred_check_branch
          %667 = sbr.rel (%p665) target = $region93
        $region92: #{gcn_forward.3} parent=88 // pred_region
          %s668 = smul.u32 16, %s20
          %p669 = scmp.lt.s32.totalorder %s668, 31
          %s670 = scalar_select %p669, %s668, 31
          %s671 = smul.addr %s670, 8
          %s672 = scalar_lea.vmem %s3, %s671
        $region93: #{gcn_forward.3} parent=88 // pred_fallthru
          _
      $region89: #{gcn_forward.3} parent=5 // pred_fallthru
        _
    $region6: #{gcn_forward.3} parent=1 // loop_footer
      %s13 = sadd.s32 1, %s9
    $region7: #{gcn_forward.3} parent=1 // loop_footer_branch
      %8 = sbr.rel target = $region3
    $region8: #{gcn_forward.3} parent=1 // loop_exit
      _

</llo_original>
